<compile_context>
chip_gen: v6e
topology: v6e:2x2x1
jax: 0.10.0
libtpu: 0.0.40
codegen_flags: <defaults>
</compile_context>

<pallas_src>
import jax
import jax.numpy as jnp
from jax.experimental import pallas as pl
from jax.experimental.pallas import tpu as pltpu

Q_PAD = 128  # lane-dense padding of the n_actions output dimension


# --------------------------------------------------------------------------
# Kernel
# --------------------------------------------------------------------------

def rnn_rollout_kernel(
    x_ref,            # (1, B, IN)  f32   per-timestep input block
    h0_ref,           # (B, H)      f32   initial hidden (constant block)
    w1_ref,           # (IN, H)     bf16  fc1 weight (pre-transposed)
    b1_ref,           # (1, H)      f32
    wxh_ref,          # (2H, 3H)    bf16  [[W_i(r|z|n)], [W_h(r|z|0)]]
    whn_ref,          # (H, H)      bf16  W_hn^T
    b3_ref,           # (1, 3H)     f32   [bir+bhr | biz+bhz | bin]
    bhn_ref,          # (1, H)      f32   hidden bias of the n gate
    w2_ref,           # (H, 128)    bf16  fc2 weight, zero-padded columns
    b2_ref,           # (1, 128)    f32   fc2 bias, zero-padded
    q_ref,            # (1, B, 128) f32   per-timestep output block
    hout_ref,         # (B, H)      f32   final hidden (constant block)
    h_scr,            # (B, H)      f32   VMEM scratch: carried hidden state
):
    t = pl.program_id(0)
    n_t = pl.num_programs(0)
    H = h0_ref.shape[-1]

    @pl.when(t == 0)
    def _():
        h_scr[...] = h0_ref[...]

    h = h_scr[...]
    x = x_ref[0]

    # fc1 + ReLU  (bf16 MXU, f32 accumulate, f32 elementwise)
    x1 = jnp.maximum(
        jnp.dot(x.astype(jnp.bfloat16), w1_ref[...],
                preferred_element_type=jnp.float32) + b1_ref[...],
        0.0,
    )

    # Fused GRU gate contraction: one (B,2H)x(2H,3H) matmul for all gates;
    # the n-gate's hidden path goes through a separate (B,H)x(H,H) matmul
    # because PyTorch applies r *inside* that term.
    xh = jnp.concatenate([x1, h], axis=-1).astype(jnp.bfloat16)          # (B, 2H)
    g = jnp.dot(xh, wxh_ref[...],
                preferred_element_type=jnp.float32) + b3_ref[...]        # (B, 3H)
    ghn = jnp.dot(h.astype(jnp.bfloat16), whn_ref[...],
                  preferred_element_type=jnp.float32)                    # (B, H)

    r = jax.nn.sigmoid(g[:, 0:H])
    z = jax.nn.sigmoid(g[:, H:2 * H])
    n = jnp.tanh(g[:, 2 * H:3 * H] + r * (ghn + bhn_ref[...]))
    h_new = (1.0 - z) * n + z * h

    # fc2 (lane-dense 128-wide output, sliced back to n_actions outside)
    q = jnp.dot(h_new.astype(jnp.bfloat16), w2_ref[...],
                preferred_element_type=jnp.float32) + b2_ref[...]

    q_ref[0] = q
    h_scr[...] = h_new

    @pl.when(t == n_t - 1)
    def _():
        hout_ref[...] = h_new


# --------------------------------------------------------------------------
# Wrappers
# --------------------------------------------------------------------------

def rnn_agent_rollout(inputs, hidden_state, params):
    """Run T GRU-agent steps in one kernel.

    inputs:        (T, B, input_dim) f32
    hidden_state:  (..., H) f32 (reshaped to (B, H), as in the module)
    returns:       q (T, B, n_actions) f32, h_final (B, H) f32
    """
    T, B, IN = inputs.shape
    H = params["b_hn"].shape[-1]
    n_actions = params["n_actions"]
    h0 = hidden_state.reshape(-1, H)

    const2d = lambda t: (0, 0)

    q_pad, h_final = pl.pallas_call(
        rnn_rollout_kernel,
        out_shape=(
            jax.ShapeDtypeStruct((T, B, Q_PAD), jnp.float32),
            jax.ShapeDtypeStruct((B, H), jnp.float32),
        ),
        grid=(T,),
        in_specs=[
            pl.BlockSpec((1, B, IN), lambda t: (t, 0, 0)),        # x: per step
            pl.BlockSpec((B, H), const2d),                        # h0
            pl.BlockSpec(params["w1"].shape, const2d),            # weights:
            pl.BlockSpec(params["b1"].shape, const2d),            #  constant
            pl.BlockSpec(params["w_xh"].shape, const2d),          #  blocks ->
            pl.BlockSpec(params["w_hn"].shape, const2d),          #  DMA once,
            pl.BlockSpec(params["b_3"].shape, const2d),           #  VMEM-
            pl.BlockSpec(params["b_hn"].shape, const2d),          #  resident
            pl.BlockSpec(params["w2"].shape, const2d),
            pl.BlockSpec(params["b2"].shape, const2d),
        ],
        out_specs=(
            pl.BlockSpec((1, B, Q_PAD), lambda t: (t, 0, 0)),     # q: per step
            pl.BlockSpec((B, H), const2d),                        # h: once
        ),
        scratch_shapes=[pltpu.VMEM((B, H), jnp.float32)],
        input_output_aliases={1: 1},  # reuse the hidden HBM buffer
        compiler_params=pltpu.CompilerParams(
            dimension_semantics=("arbitrary",)),
    )(inputs, h0, params["w1"], params["b1"], params["w_xh"],
      params["w_hn"], params["b_3"], params["b_hn"],
      params["w2"], params["b2"])

    return q_pad[..., :n_actions], h_final


def rnn_agent_forward(inputs, hidden_state, params):
    """Single-step forward with the exact module signature semantics."""
    q, h = rnn_agent_rollout(inputs[None], hidden_state, params)
    return q[0], h


# --------------------------------------------------------------------------
# Parameter construction (PyTorch layouts), fusion for the kernel, reference.
# --------------------------------------------------------------------------

def init_torch_params(key, input_dim, H, n_actions):
    """Weights in the same layouts PyTorch stores them."""
    ks = jax.random.split(key, 8)

    def u(k, shape, fan_in):
        bound = 1.0 / jnp.sqrt(fan_in)
        return jax.random.uniform(k, shape, jnp.float32, -bound, bound)

    return {
        "fc1_w": u(ks[0], (H, input_dim), input_dim),   # (out, in)
        "fc1_b": u(ks[1], (H,), input_dim),
        "w_ih": u(ks[2], (3 * H, H), H),                # rows [W_ir; W_iz; W_in]
        "w_hh": u(ks[3], (3 * H, H), H),                # rows [W_hr; W_hz; W_hn]
        "b_ih": u(ks[4], (3 * H,), H),
        "b_hh": u(ks[5], (3 * H,), H),
        "fc2_w": u(ks[6], (n_actions, H), H),
        "fc2_b": u(ks[7], (n_actions,), H),
    }


def fuse_params(tp, H, n_actions):
    """Pre-transpose, fuse gate weights, fold biases, pad fc2 lane-dense."""
    w_i = tp["w_ih"].T                              # (H, 3H), cols [r|z|n]
    w_h = tp["w_hh"].T                              # (H, 3H)
    w_h_rz = w_h.at[:, 2 * H:3 * H].set(0.0)        # zero the n-gate block
    w_xh = jnp.concatenate([w_i, w_h_rz], axis=0)   # (2H, 3H)

    b_ih, b_hh = tp["b_ih"], tp["b_hh"]
    b_3 = jnp.concatenate(
        [b_ih[0:H] + b_hh[0:H],              # r biases always summed
         b_ih[H:2 * H] + b_hh[H:2 * H],      # z biases always summed
         b_ih[2 * H:3 * H]])[None, :]        # input bias of n gate

    w2 = jnp.zeros((H, Q_PAD), jnp.float32).at[:, :n_actions].set(tp["fc2_w"].T)
    b2 = jnp.zeros((1, Q_PAD), jnp.float32).at[:, :n_actions].set(tp["fc2_b"])

    return {
        "w1": tp["fc1_w"].T.astype(jnp.bfloat16),            # (IN, H)
        "b1": tp["fc1_b"][None, :],                          # (1, H)  f32
        "w_xh": w_xh.astype(jnp.bfloat16),                   # (2H, 3H)
        "w_hn": w_h[:, 2 * H:3 * H].astype(jnp.bfloat16),    # (H, H)
        "b_3": b_3,                                          # (1, 3H) f32
        "b_hn": b_hh[2 * H:3 * H][None, :],                  # (1, H)  f32
        "w2": w2.astype(jnp.bfloat16),                       # (H, 128)
        "b2": b2,                                            # (1, 128) f32
        "n_actions": n_actions,
    }


def reference_step(x, h, tp, H):
    """Pure-JAX f32 reference of the PyTorch module's single-step forward."""
    x1 = jnp.maximum(x @ tp["fc1_w"].T + tp["fc1_b"], 0.0)
    gi = x1 @ tp["w_ih"].T + tp["b_ih"]
    gh = h @ tp["w_hh"].T + tp["b_hh"]
    r = jax.nn.sigmoid(gi[:, 0:H] + gh[:, 0:H])
    z = jax.nn.sigmoid(gi[:, H:2 * H] + gh[:, H:2 * H])
    n = jnp.tanh(gi[:, 2 * H:3 * H] + r * gh[:, 2 * H:3 * H])
    h_new = (1.0 - z) * n + z * h
    q = h_new @ tp["fc2_w"].T + tp["fc2_b"]
    return q, h_new


def reference_rollout(inputs, h0, tp, H):
    def step(h, x):
        q, h_new = reference_step(x, h, tp, H)
        return h_new, q
    h_final, qs = jax.lax.scan(step, h0, inputs)
    return qs, h_final


if __name__ == "__main__":
    T = 8              # rollout length handled inside one kernel call
    B = 128            # n_agents * batch_size_run, stacked (>= 8 sublanes)
    INPUT_DIM = 24     # input_shape
    HIDDEN = 32        # args.rnn_hidden_action_decoder_dim
    N_ACTIONS = 12     # args.n_actions

    key = jax.random.PRNGKey(0)
    k_in, k_h, k_p = jax.random.split(key, 3)

    inputs = jax.random.normal(k_in, (T, B, INPUT_DIM), jnp.float32)
    # init_hidden() is zeros; random hidden exercises the GRU path, reshaped
    # to (-1, H) exactly like the module's forward.
    hidden = jax.random.normal(k_h, (B, 1, HIDDEN), jnp.float32)

    torch_params = init_torch_params(k_p, INPUT_DIM, HIDDEN, N_ACTIONS)
    kernel_params = fuse_params(torch_params, HIDDEN, N_ACTIONS)

    # References first: the kernel aliases the hidden buffer to its h output.
    q_ref, h_ref = reference_rollout(
        inputs, hidden.reshape(-1, HIDDEN), torch_params, HIDDEN)
    q1_ref, h1_ref = reference_step(
        inputs[0], hidden.reshape(-1, HIDDEN), torch_params, HIDDEN)

    # Rollout kernel (T timesteps, weights VMEM-resident, h carried in VMEM).
    q, h = rnn_agent_rollout(inputs, hidden, kernel_params)
    q = jax.block_until_ready(q)
    h = jax.block_until_ready(h)

    # Single-step call matching the module forward exactly.
    q1, h1 = rnn_agent_forward(inputs[0], hidden, kernel_params)
    q1 = jax.block_until_ready(q1)
    h1 = jax.block_until_ready(h1)

    assert q.shape == (T, B, N_ACTIONS) and h.shape == (B, HIDDEN)
    # bf16 matmul operands with f32 accumulation -> bf16-level tolerance.
    assert jnp.allclose(q, q_ref, atol=5e-2, rtol=5e-2), "rollout q mismatch"
    assert jnp.allclose(h, h_ref, atol=5e-2, rtol=5e-2), "rollout h mismatch"
    assert jnp.allclose(q1, q1_ref, atol=5e-2, rtol=5e-2), "step q mismatch"
    assert jnp.allclose(h1, h1_ref, atol=5e-2, rtol=5e-2), "step h mismatch"

    print("KERNEL_OK")
</pallas_src>

<mosaic_0001>
module attributes {stable_mosaic.version = 11 : i64} {
  func.func @rnn_rollout_kernel(%arg0: i32, %arg1: memref<1x128x24xf32, #tpu.memory_space<vmem>>, %arg2: memref<128x32xf32, #tpu.memory_space<vmem>>, %arg3: memref<24x32xbf16, #tpu.memory_space<vmem>>, %arg4: memref<1x32xf32, #tpu.memory_space<vmem>>, %arg5: memref<64x96xbf16, #tpu.memory_space<vmem>>, %arg6: memref<32x32xbf16, #tpu.memory_space<vmem>>, %arg7: memref<1x96xf32, #tpu.memory_space<vmem>>, %arg8: memref<1x32xf32, #tpu.memory_space<vmem>>, %arg9: memref<32x128xbf16, #tpu.memory_space<vmem>>, %arg10: memref<1x128xf32, #tpu.memory_space<vmem>>, %arg11: memref<1x128x128xf32, #tpu.memory_space<vmem>>, %arg12: memref<128x32xf32, #tpu.memory_space<vmem>>, %arg13: memref<128x32xf32, #tpu.memory_space<vmem>>) attributes {dimension_semantics = [#tpu.dimension_semantics<arbitrary>], iteration_bounds = array<i64: 8>, scalar_prefetch = 0 : i64, scratch_operands = 1 : i64, tpu.core_type = #tpu.core_type<tc>, window_params = [{transform_indices = @transform_0, window_bounds = array<i64: 1, 128, 24>}, {pipeline_mode = #tpu.pipeline_mode<synchronous>, transform_indices = @transform_1, window_bounds = array<i64: 128, 32>}, {pipeline_mode = #tpu.pipeline_mode<synchronous>, transform_indices = @transform_2, window_bounds = array<i64: 24, 32>}, {pipeline_mode = #tpu.pipeline_mode<synchronous>, transform_indices = @transform_3, window_bounds = array<i64: 1, 32>}, {pipeline_mode = #tpu.pipeline_mode<synchronous>, transform_indices = @transform_4, window_bounds = array<i64: 64, 96>}, {pipeline_mode = #tpu.pipeline_mode<synchronous>, transform_indices = @transform_5, window_bounds = array<i64: 32, 32>}, {pipeline_mode = #tpu.pipeline_mode<synchronous>, transform_indices = @transform_6, window_bounds = array<i64: 1, 96>}, {pipeline_mode = #tpu.pipeline_mode<synchronous>, transform_indices = @transform_7, window_bounds = array<i64: 1, 32>}, {pipeline_mode = #tpu.pipeline_mode<synchronous>, transform_indices = @transform_8, window_bounds = array<i64: 32, 128>}, {pipeline_mode = #tpu.pipeline_mode<synchronous>, transform_indices = @transform_9, window_bounds = array<i64: 1, 128>}, {transform_indices = @transform_10, window_bounds = array<i64: 1, 128, 128>}, {pipeline_mode = #tpu.pipeline_mode<synchronous>, transform_indices = @transform_11, window_bounds = array<i64: 128, 32>}]} {
    %c0_i32 = arith.constant 0 : i32
    %0 = arith.cmpi eq, %arg0, %c0_i32 : i32
    %1 = arith.extui %0 : i1 to i32
    %c0_i32_0 = arith.constant 0 : i32
    %2 = arith.cmpi ne, %1, %c0_i32_0 : i32
    scf.if %2 {
      %c0_34 = arith.constant 0 : index
      %c0_35 = arith.constant 0 : index
      %61 = vector.load %arg2[%c0_34, %c0_35] : memref<128x32xf32, #tpu.memory_space<vmem>>, vector<128x32xf32>
      %c0_36 = arith.constant 0 : index
      %c0_37 = arith.constant 0 : index
      %62 = vector.load %arg13[%c0_36, %c0_37] : memref<128x32xf32, #tpu.memory_space<vmem>>, vector<128x32xf32>
      tpu.vector_store %arg13[%c0_36, %c0_37], %61 {strides = array<i32>} : memref<128x32xf32, #tpu.memory_space<vmem>>, vector<128x32xf32>,
    } else {
    }
    %c0 = arith.constant 0 : index
    %c0_1 = arith.constant 0 : index
    %3 = vector.load %arg13[%c0, %c0_1] : memref<128x32xf32, #tpu.memory_space<vmem>>, vector<128x32xf32>
    %c0_2 = arith.constant 0 : index
    %c0_3 = arith.constant 0 : index
    %c0_4 = arith.constant 0 : index
    %4 = vector.load %arg1[%c0_2, %c0_3, %c0_4] : memref<1x128x24xf32, #tpu.memory_space<vmem>>, vector<1x128x24xf32>
    %5 = vector.shape_cast %4 : vector<1x128x24xf32> to vector<128x24xf32>
    %6 = arith.truncf %5 : vector<128x24xf32> to vector<128x24xbf16>
    %c0_5 = arith.constant 0 : index
    %c0_6 = arith.constant 0 : index
    %7 = vector.load %arg3[%c0_5, %c0_6] : memref<24x32xbf16, #tpu.memory_space<vmem>>, vector<24x32xbf16>
    %cst = arith.constant dense<0.000000e+00> : vector<128x32xf32>
    %8 = tpu.matmul %6, %7, %cst {dimension_numbers = #tpu.dot_dimension_numbers<[1], [0], [0], [1], [0, 0, 1, 1], [], []>} : vector<128x24xbf16>, vector<24x32xbf16>, vector<128x32xf32> -> vector<128x32xf32>
    %c0_7 = arith.constant 0 : index
    %c0_8 = arith.constant 0 : index
    %9 = vector.load %arg4[%c0_7, %c0_8] : memref<1x32xf32, #tpu.memory_space<vmem>>, vector<1x32xf32>
    %10 = vector.broadcast %9 : vector<1x32xf32> to vector<128x32xf32>
    %11 = arith.addf %8, %10 : vector<128x32xf32>
    %cst_9 = arith.constant 0.000000e+00 : f32
    %12 = vector.broadcast %cst_9 : f32 to vector<128x32xf32>
    %13 = arith.maximumf %11, %12 : vector<128x32xf32>
    %14 = tpu.concatenate %13, %3 in 1 : vector<128x32xf32>, vector<128x32xf32> -> vector<128x64xf32>
    %15 = arith.truncf %14 : vector<128x64xf32> to vector<128x64xbf16>
    %c0_10 = arith.constant 0 : index
    %c0_11 = arith.constant 0 : index
    %16 = vector.load %arg5[%c0_10, %c0_11] : memref<64x96xbf16, #tpu.memory_space<vmem>>, vector<64x96xbf16>
    %cst_12 = arith.constant dense<0.000000e+00> : vector<128x96xf32>
    %17 = tpu.matmul %15, %16, %cst_12 {dimension_numbers = #tpu.dot_dimension_numbers<[1], [0], [0], [1], [0, 0, 1, 1], [], []>} : vector<128x64xbf16>, vector<64x96xbf16>, vector<128x96xf32> -> vector<128x96xf32>
    %c0_13 = arith.constant 0 : index
    %c0_14 = arith.constant 0 : index
    %18 = vector.load %arg7[%c0_13, %c0_14] : memref<1x96xf32, #tpu.memory_space<vmem>>, vector<1x96xf32>
    %19 = vector.broadcast %18 : vector<1x96xf32> to vector<128x96xf32>
    %20 = arith.addf %17, %19 : vector<128x96xf32>
    %21 = arith.truncf %3 : vector<128x32xf32> to vector<128x32xbf16>
    %c0_15 = arith.constant 0 : index
    %c0_16 = arith.constant 0 : index
    %22 = vector.load %arg6[%c0_15, %c0_16] : memref<32x32xbf16, #tpu.memory_space<vmem>>, vector<32x32xbf16>
    %cst_17 = arith.constant dense<0.000000e+00> : vector<128x32xf32>
    %23 = tpu.matmul %21, %22, %cst_17 {dimension_numbers = #tpu.dot_dimension_numbers<[1], [0], [0], [1], [0, 0, 1, 1], [], []>} : vector<128x32xbf16>, vector<32x32xbf16>, vector<128x32xf32> -> vector<128x32xf32>
    %24 = vector.extract_strided_slice %20 {offsets = [0, 0], sizes = [128, 32], strides = [1, 1]} : vector<128x96xf32> to vector<128x32xf32>
    %25 = arith.negf %24 : vector<128x32xf32>
    %26 = math.exp %25 : vector<128x32xf32>
    %cst_18 = arith.constant 1.000000e+00 : f32
    %27 = vector.broadcast %cst_18 : f32 to vector<128x32xf32>
    %28 = arith.addf %27, %26 : vector<128x32xf32>
    %29 = arith.divf %27, %28 : vector<128x32xf32>
    %30 = vector.extract_strided_slice %20 {offsets = [0, 32], sizes = [128, 32], strides = [1, 1]} : vector<128x96xf32> to vector<128x32xf32>
    %31 = arith.negf %30 : vector<128x32xf32>
    %32 = math.exp %31 : vector<128x32xf32>
    %cst_19 = arith.constant 1.000000e+00 : f32
    %33 = vector.broadcast %cst_19 : f32 to vector<128x32xf32>
    %34 = arith.addf %33, %32 : vector<128x32xf32>
    %35 = arith.divf %33, %34 : vector<128x32xf32>
    %36 = vector.extract_strided_slice %20 {offsets = [0, 64], sizes = [128, 32], strides = [1, 1]} : vector<128x96xf32> to vector<128x32xf32>
    %c0_20 = arith.constant 0 : index
    %c0_21 = arith.constant 0 : index
    %37 = vector.load %arg8[%c0_20, %c0_21] : memref<1x32xf32, #tpu.memory_space<vmem>>, vector<1x32xf32>
    %38 = vector.broadcast %37 : vector<1x32xf32> to vector<128x32xf32>
    %39 = arith.addf %23, %38 : vector<128x32xf32>
    %40 = arith.mulf %29, %39 : vector<128x32xf32>
    %41 = arith.addf %36, %40 : vector<128x32xf32>
    %42 = math.tanh %41 : vector<128x32xf32>
    %cst_22 = arith.constant 1.000000e+00 : f32
    %43 = vector.broadcast %cst_22 : f32 to vector<128x32xf32>
    %44 = arith.subf %43, %35 : vector<128x32xf32>
    %45 = arith.mulf %44, %42 : vector<128x32xf32>
    %46 = arith.mulf %35, %3 : vector<128x32xf32>
    %47 = arith.addf %45, %46 : vector<128x32xf32>
    %48 = arith.truncf %47 : vector<128x32xf32> to vector<128x32xbf16>
    %c0_23 = arith.constant 0 : index
    %c0_24 = arith.constant 0 : index
    %49 = vector.load %arg9[%c0_23, %c0_24] : memref<32x128xbf16, #tpu.memory_space<vmem>>, vector<32x128xbf16>
    %cst_25 = arith.constant dense<0.000000e+00> : vector<128x128xf32>
    %50 = tpu.matmul %48, %49, %cst_25 {dimension_numbers = #tpu.dot_dimension_numbers<[1], [0], [0], [1], [0, 0, 1, 1], [], []>} : vector<128x32xbf16>, vector<32x128xbf16>, vector<128x128xf32> -> vector<128x128xf32>
    %c0_26 = arith.constant 0 : index
    %c0_27 = arith.constant 0 : index
    %51 = vector.load %arg10[%c0_26, %c0_27] : memref<1x128xf32, #tpu.memory_space<vmem>>, vector<1x128xf32>
    %52 = vector.broadcast %51 : vector<1x128xf32> to vector<128x128xf32>
    %53 = arith.addf %50, %52 : vector<128x128xf32>
    %c0_28 = arith.constant 0 : index
    %c0_29 = arith.constant 0 : index
    %c0_30 = arith.constant 0 : index
    %54 = vector.load %arg11[%c0_28, %c0_29, %c0_30] : memref<1x128x128xf32, #tpu.memory_space<vmem>>, vector<1x128x128xf32>
    %55 = vector.shape_cast %54 : vector<1x128x128xf32> to vector<128x128xf32>
    %56 = vector.shape_cast %53 : vector<128x128xf32> to vector<1x128x128xf32>
    tpu.vector_store %arg11[%c0_28, %c0_29, %c0_30], %56 {strides = array<i32>} : memref<1x128x128xf32, #tpu.memory_space<vmem>>, vector<1x128x128xf32>,
    %c0_31 = arith.constant 0 : index
    %c0_32 = arith.constant 0 : index
    %57 = vector.load %arg13[%c0_31, %c0_32] : memref<128x32xf32, #tpu.memory_space<vmem>>, vector<128x32xf32>
    tpu.vector_store %arg13[%c0_31, %c0_32], %47 {strides = array<i32>} : memref<128x32xf32, #tpu.memory_space<vmem>>, vector<128x32xf32>,
    %c7_i32 = arith.constant 7 : i32
    %58 = arith.cmpi eq, %arg0, %c7_i32 : i32
    %59 = arith.extui %58 : i1 to i32
    %c0_i32_33 = arith.constant 0 : i32
    %60 = arith.cmpi ne, %59, %c0_i32_33 : i32
    scf.if %60 {
      %c0_34 = arith.constant 0 : index
      %c0_35 = arith.constant 0 : index
      %61 = vector.load %arg12[%c0_34, %c0_35] : memref<128x32xf32, #tpu.memory_space<vmem>>, vector<128x32xf32>
      tpu.vector_store %arg12[%c0_34, %c0_35], %47 {strides = array<i32>} : memref<128x32xf32, #tpu.memory_space<vmem>>, vector<128x32xf32>,
    } else {
    }
    return
  }
  func.func @transform_0(%arg0: i32) -> (i32, i32, i32) {
    %c0_i32 = arith.constant 0 : i32
    %c0_i32_0 = arith.constant 0 : i32
    %c0_i32_1 = arith.constant 0 : i32
    return %arg0, %c0_i32, %c0_i32_0 : i32, i32, i32
  }
  func.func @transform_1(%arg0: i32) -> (i32, i32) {
    %c0_i32 = arith.constant 0 : i32
    %c0_i32_0 = arith.constant 0 : i32
    %c0_i32_1 = arith.constant 0 : i32
    return %c0_i32, %c0_i32_0 : i32, i32
  }
  func.func @transform_2(%arg0: i32) -> (i32, i32) {
    %c0_i32 = arith.constant 0 : i32
    %c0_i32_0 = arith.constant 0 : i32
    %c0_i32_1 = arith.constant 0 : i32
    return %c0_i32, %c0_i32_0 : i32, i32
  }
  func.func @transform_3(%arg0: i32) -> (i32, i32) {
    %c0_i32 = arith.constant 0 : i32
    %c0_i32_0 = arith.constant 0 : i32
    %c0_i32_1 = arith.constant 0 : i32
    return %c0_i32, %c0_i32_0 : i32, i32
  }
  func.func @transform_4(%arg0: i32) -> (i32, i32) {
    %c0_i32 = arith.constant 0 : i32
    %c0_i32_0 = arith.constant 0 : i32
    %c0_i32_1 = arith.constant 0 : i32
    return %c0_i32, %c0_i32_0 : i32, i32
  }
  func.func @transform_5(%arg0: i32) -> (i32, i32) {
    %c0_i32 = arith.constant 0 : i32
    %c0_i32_0 = arith.constant 0 : i32
    %c0_i32_1 = arith.constant 0 : i32
    return %c0_i32, %c0_i32_0 : i32, i32
  }
  func.func @transform_6(%arg0: i32) -> (i32, i32) {
    %c0_i32 = arith.constant 0 : i32
    %c0_i32_0 = arith.constant 0 : i32
    %c0_i32_1 = arith.constant 0 : i32
    return %c0_i32, %c0_i32_0 : i32, i32
  }
  func.func @transform_7(%arg0: i32) -> (i32, i32) {
    %c0_i32 = arith.constant 0 : i32
    %c0_i32_0 = arith.constant 0 : i32
    %c0_i32_1 = arith.constant 0 : i32
    return %c0_i32, %c0_i32_0 : i32, i32
  }
  func.func @transform_8(%arg0: i32) -> (i32, i32) {
    %c0_i32 = arith.constant 0 : i32
    %c0_i32_0 = arith.constant 0 : i32
    %c0_i32_1 = arith.constant 0 : i32
    return %c0_i32, %c0_i32_0 : i32, i32
  }
  func.func @transform_9(%arg0: i32) -> (i32, i32) {
    %c0_i32 = arith.constant 0 : i32
    %c0_i32_0 = arith.constant 0 : i32
    %c0_i32_1 = arith.constant 0 : i32
    return %c0_i32, %c0_i32_0 : i32, i32
  }
  func.func @transform_10(%arg0: i32) -> (i32, i32, i32) {
    %c0_i32 = arith.constant 0 : i32
    %c0_i32_0 = arith.constant 0 : i32
    %c0_i32_1 = arith.constant 0 : i32
    return %arg0, %c0_i32, %c0_i32_0 : i32, i32, i32
  }
  func.func @transform_11(%arg0: i32) -> (i32, i32) {
    %c0_i32 = arith.constant 0 : i32
    %c0_i32_0 = arith.constant 0 : i32
    %c0_i32_1 = arith.constant 0 : i32
    return %c0_i32, %c0_i32_0 : i32, i32
  }
}

</mosaic_0001>

<llo_original>
// kernel: tpu_custom_call.1
$region0: #{tpu_custom_call.1}
  #allocation0 [shape = 'u32[]', space=smem, size = 0x4, offset = 0x4, fixed_abs, tag = 'smem constant byte address 0x4 - core index']
  #allocation1 [shape = 'u32[144,128]{1,0:T(1,128)}', space=vmem, size = 0x12000, scoped, tag = 'internal scratch']
  #allocation2 [shape = 'f32[128,32]{1,0:T(8,128)}', space=vmem, size = 0x10000, scoped, tag = 'scratch operand']
  %s0 = inlined_call_operand.vmem [shape: f32[8,128,24], index: 0, kind: input, shape index: {}]
  %s1 = inlined_call_operand.vmem [shape: f32[128,32], index: 1, kind: input, shape index: {}, may-alias: {1,11}]
  %s2 = inlined_call_operand.vmem [shape: bf16[24,32], index: 2, kind: input, shape index: {}]
  %s3 = inlined_call_operand.vmem [shape: f32[1,32], index: 3, kind: input, shape index: {}]
  %s4 = inlined_call_operand.vmem [shape: bf16[64,96], index: 4, kind: input, shape index: {}]
  %s5 = inlined_call_operand.vmem [shape: bf16[32,32], index: 5, kind: input, shape index: {}]
  %s6 = inlined_call_operand.vmem [shape: f32[1,96], index: 6, kind: input, shape index: {}]
  %s7 = inlined_call_operand.vmem [shape: f32[1,32], index: 7, kind: input, shape index: {}]
  %s8 = inlined_call_operand.vmem [shape: bf16[32,128], index: 8, kind: input, shape index: {}]
  %s9 = inlined_call_operand.vmem [shape: f32[1,128], index: 9, kind: input, shape index: {}]
  %s10 = inlined_call_operand.hbm [shape: f32[8,128,128], index: 10, kind: output, shape index: {0}]
  %s11 = inlined_call_operand.vmem [shape: f32[128,32], index: 11, kind: output, shape index: {1}, may-alias: {1,11}]
  %12 = xla_tuple %s10, %s11
  %s13 = sld [smem:[#allocation0]]
  $region89: #{tpu_custom_call.1} parent=0
    _
  %s15 = ssub.s32 1, %s13
  %s16 = scalar_select 0, %s15, %s13
  $region1: #{tpu_custom_call.1} parent=0
    #allocation3 [shape = 'u8[131072]{0}', space=vmem, size = 0x20000, scoped, tag = 'output window, operand 0']
    #allocation4 [shape = 's32[2]{0}', space=sflag, size = 0x8, scoped, tag = 'scoped memory for tpu_custom_call.1']
    %17 = vsyncpa [#allocation4], 0
    %s18 = scalar_lea.sflag [#allocation4], 1
    %19 = vsyncpa %s18, 0
    loop: start=0, step=1, limit=10
    $region2: #{tpu_custom_call.1} parent=1 // loop_pre_header
      _
    $region3: #{tpu_custom_call.1} parent=1 // loop_header
      %s21 = sphi 0, %s25
      %p22 = scmp.ge.s32.totalorder %s21, 10
      %s31 = sphi 0, %s33
      %s34 = sphi 0, %s31
      %s35 = sphi 0, %s34
      %s51 = sphi 0, %s35
      %s55 = sphi 0, %s55
      %s57 = sphi 0, %s55
      %s58 = sphi 0, %s57
      %s72 = sphi 0, %s58
      %s76 = sphi 0, %s76
      %s78 = sphi 0, %s76
      %s79 = sphi 0, %s78
      %s93 = sphi 0, %s79
      %s97 = sphi 0, %s97
      %s99 = sphi 0, %s97
      %s100 = sphi 0, %s99
      %s114 = sphi 0, %s100
      %s118 = sphi 0, %s118
      %s120 = sphi 0, %s118
      %s121 = sphi 0, %s120
      %s135 = sphi 0, %s121
      %s139 = sphi 0, %s139
      %s141 = sphi 0, %s139
      %s142 = sphi 0, %s141
      %s156 = sphi 0, %s142
      %s160 = sphi 0, %s160
      %s162 = sphi 0, %s160
      %s163 = sphi 0, %s162
      %s177 = sphi 0, %s163
      %s181 = sphi 0, %s181
      %s183 = sphi 0, %s181
      %s184 = sphi 0, %s183
      %s198 = sphi 0, %s184
      %s202 = sphi 0, %s202
      %s204 = sphi 0, %s202
      %s205 = sphi 0, %s204
      %s219 = sphi 0, %s205
      %s223 = sphi 0, %s223
      %s225 = sphi 0, %s223
      %s226 = sphi 0, %s225
      %s240 = sphi 0, %s226
      %s246 = sphi 0, %s248
      %s249 = sphi 0, %s246
      %s250 = sphi 0, %s249
      %s266 = sphi 0, %s250
      %s270 = sphi 0, %s270
      %s272 = sphi 0, %s270
      %s273 = sphi 0, %s272
      %s287 = sphi 0, %s273
    $region4: #{tpu_custom_call.1} parent=1 // loop_header_branch
      %24 = sbr.rel (%p22) target = $region8
    $region5: #{tpu_custom_call.1} parent=1 // loop_body
      %s26 = ssub.s32 %s21, 1
      %s27 = ssub.s32 %s21, 2
      %s28 = sadd.s32 %s21, 1
      %s29 = ssub.s32 %s21, %s28
      %p30 = scmp.eq.s32.totalorder %s29, 0
      %s32 = sadd.s32 %s31, 1
      %s33 = scalar_select %p30, %s31, %s32
      %p36 = pneg %p30
      %p37 = scmp.eq.s32.totalorder %s21, 7
      %p38 = por %p36, %p37
      %p39 = scmp.ne.s32.totalorder %s31, %s34
      %p40 = scmp.eq.s32.totalorder %s21, 0
      %p41 = por %p39, %p40
      %p42 = scmp.ne.s32.totalorder %s31, %s34
      %p43 = scmp.eq.s32.totalorder %s26, 7
      %p44 = por %p42, %p43
      %p45 = scmp.ne.s32.totalorder %s34, %s35
      %p46 = scmp.eq.s32.totalorder %s26, 0
      %p47 = por %p45, %p46
      %p48 = scmp.ne.s32.totalorder %s34, %s35
      %p49 = scmp.eq.s32.totalorder %s27, 7
      %p50 = por %p48, %p49
      %p52 = scmp.ne.s32.totalorder %s35, %s51
      %p53 = scmp.eq.s32.totalorder %s27, 0
      %p54 = por %p52, %p53
      %s56 = sadd.s32 %s55, 1
      %p59 = scmp.eq.s32.totalorder %s21, 7
      %p60 = scmp.ne.s32.totalorder %s55, %s57
      %p61 = scmp.eq.s32.totalorder %s21, 0
      %p62 = por %p60, %p61
      %p63 = scmp.ne.s32.totalorder %s55, %s57
      %p64 = scmp.eq.s32.totalorder %s26, 7
      %p65 = por %p63, %p64
      %p66 = scmp.ne.s32.totalorder %s57, %s58
      %p67 = scmp.eq.s32.totalorder %s26, 0
      %p68 = por %p66, %p67
      %p69 = scmp.ne.s32.totalorder %s57, %s58
      %p70 = scmp.eq.s32.totalorder %s27, 7
      %p71 = por %p69, %p70
      %p73 = scmp.ne.s32.totalorder %s58, %s72
      %p74 = scmp.eq.s32.totalorder %s27, 0
      %p75 = por %p73, %p74
      %s77 = sadd.s32 %s76, 1
      %p80 = scmp.eq.s32.totalorder %s21, 7
      %p81 = scmp.ne.s32.totalorder %s76, %s78
      %p82 = scmp.eq.s32.totalorder %s21, 0
      %p83 = por %p81, %p82
      %p84 = scmp.ne.s32.totalorder %s76, %s78
      %p85 = scmp.eq.s32.totalorder %s26, 7
      %p86 = por %p84, %p85
      %p87 = scmp.ne.s32.totalorder %s78, %s79
      %p88 = scmp.eq.s32.totalorder %s26, 0
      %p89 = por %p87, %p88
      %p90 = scmp.ne.s32.totalorder %s78, %s79
      %p91 = scmp.eq.s32.totalorder %s27, 7
      %p92 = por %p90, %p91
      %p94 = scmp.ne.s32.totalorder %s79, %s93
      %p95 = scmp.eq.s32.totalorder %s27, 0
      %p96 = por %p94, %p95
      %s98 = sadd.s32 %s97, 1
      %p101 = scmp.eq.s32.totalorder %s21, 7
      %p102 = scmp.ne.s32.totalorder %s97, %s99
      %p103 = scmp.eq.s32.totalorder %s21, 0
      %p104 = por %p102, %p103
      %p105 = scmp.ne.s32.totalorder %s97, %s99
      %p106 = scmp.eq.s32.totalorder %s26, 7
      %p107 = por %p105, %p106
      %p108 = scmp.ne.s32.totalorder %s99, %s100
      %p109 = scmp.eq.s32.totalorder %s26, 0
      %p110 = por %p108, %p109
      %p111 = scmp.ne.s32.totalorder %s99, %s100
      %p112 = scmp.eq.s32.totalorder %s27, 7
      %p113 = por %p111, %p112
      %p115 = scmp.ne.s32.totalorder %s100, %s114
      %p116 = scmp.eq.s32.totalorder %s27, 0
      %p117 = por %p115, %p116
      %s119 = sadd.s32 %s118, 1
      %p122 = scmp.eq.s32.totalorder %s21, 7
      %p123 = scmp.ne.s32.totalorder %s118, %s120
      %p124 = scmp.eq.s32.totalorder %s21, 0
      %p125 = por %p123, %p124
      %p126 = scmp.ne.s32.totalorder %s118, %s120
      %p127 = scmp.eq.s32.totalorder %s26, 7
      %p128 = por %p126, %p127
      %p129 = scmp.ne.s32.totalorder %s120, %s121
      %p130 = scmp.eq.s32.totalorder %s26, 0
      %p131 = por %p129, %p130
      %p132 = scmp.ne.s32.totalorder %s120, %s121
      %p133 = scmp.eq.s32.totalorder %s27, 7
      %p134 = por %p132, %p133
      %p136 = scmp.ne.s32.totalorder %s121, %s135
      %p137 = scmp.eq.s32.totalorder %s27, 0
      %p138 = por %p136, %p137
      %s140 = sadd.s32 %s139, 1
      %p143 = scmp.eq.s32.totalorder %s21, 7
      %p144 = scmp.ne.s32.totalorder %s139, %s141
      %p145 = scmp.eq.s32.totalorder %s21, 0
      %p146 = por %p144, %p145
      %p147 = scmp.ne.s32.totalorder %s139, %s141
      %p148 = scmp.eq.s32.totalorder %s26, 7
      %p149 = por %p147, %p148
      %p150 = scmp.ne.s32.totalorder %s141, %s142
      %p151 = scmp.eq.s32.totalorder %s26, 0
      %p152 = por %p150, %p151
      %p153 = scmp.ne.s32.totalorder %s141, %s142
      %p154 = scmp.eq.s32.totalorder %s27, 7
      %p155 = por %p153, %p154
      %p157 = scmp.ne.s32.totalorder %s142, %s156
      %p158 = scmp.eq.s32.totalorder %s27, 0
      %p159 = por %p157, %p158
      %s161 = sadd.s32 %s160, 1
      %p164 = scmp.eq.s32.totalorder %s21, 7
      %p165 = scmp.ne.s32.totalorder %s160, %s162
      %p166 = scmp.eq.s32.totalorder %s21, 0
      %p167 = por %p165, %p166
      %p168 = scmp.ne.s32.totalorder %s160, %s162
      %p169 = scmp.eq.s32.totalorder %s26, 7
      %p170 = por %p168, %p169
      %p171 = scmp.ne.s32.totalorder %s162, %s163
      %p172 = scmp.eq.s32.totalorder %s26, 0
      %p173 = por %p171, %p172
      %p174 = scmp.ne.s32.totalorder %s162, %s163
      %p175 = scmp.eq.s32.totalorder %s27, 7
      %p176 = por %p174, %p175
      %p178 = scmp.ne.s32.totalorder %s163, %s177
      %p179 = scmp.eq.s32.totalorder %s27, 0
      %p180 = por %p178, %p179
      %s182 = sadd.s32 %s181, 1
      %p185 = scmp.eq.s32.totalorder %s21, 7
      %p186 = scmp.ne.s32.totalorder %s181, %s183
      %p187 = scmp.eq.s32.totalorder %s21, 0
      %p188 = por %p186, %p187
      %p189 = scmp.ne.s32.totalorder %s181, %s183
      %p190 = scmp.eq.s32.totalorder %s26, 7
      %p191 = por %p189, %p190
      %p192 = scmp.ne.s32.totalorder %s183, %s184
      %p193 = scmp.eq.s32.totalorder %s26, 0
      %p194 = por %p192, %p193
      %p195 = scmp.ne.s32.totalorder %s183, %s184
      %p196 = scmp.eq.s32.totalorder %s27, 7
      %p197 = por %p195, %p196
      %p199 = scmp.ne.s32.totalorder %s184, %s198
      %p200 = scmp.eq.s32.totalorder %s27, 0
      %p201 = por %p199, %p200
      %s203 = sadd.s32 %s202, 1
      %p206 = scmp.eq.s32.totalorder %s21, 7
      %p207 = scmp.ne.s32.totalorder %s202, %s204
      %p208 = scmp.eq.s32.totalorder %s21, 0
      %p209 = por %p207, %p208
      %p210 = scmp.ne.s32.totalorder %s202, %s204
      %p211 = scmp.eq.s32.totalorder %s26, 7
      %p212 = por %p210, %p211
      %p213 = scmp.ne.s32.totalorder %s204, %s205
      %p214 = scmp.eq.s32.totalorder %s26, 0
      %p215 = por %p213, %p214
      %p216 = scmp.ne.s32.totalorder %s204, %s205
      %p217 = scmp.eq.s32.totalorder %s27, 7
      %p218 = por %p216, %p217
      %p220 = scmp.ne.s32.totalorder %s205, %s219
      %p221 = scmp.eq.s32.totalorder %s27, 0
      %p222 = por %p220, %p221
      %s224 = sadd.s32 %s223, 1
      %p227 = scmp.eq.s32.totalorder %s21, 7
      %p228 = scmp.ne.s32.totalorder %s223, %s225
      %p229 = scmp.eq.s32.totalorder %s21, 0
      %p230 = por %p228, %p229
      %p231 = scmp.ne.s32.totalorder %s223, %s225
      %p232 = scmp.eq.s32.totalorder %s26, 7
      %p233 = por %p231, %p232
      %p234 = scmp.ne.s32.totalorder %s225, %s226
      %p235 = scmp.eq.s32.totalorder %s26, 0
      %p236 = por %p234, %p235
      %p237 = scmp.ne.s32.totalorder %s225, %s226
      %p238 = scmp.eq.s32.totalorder %s27, 7
      %p239 = por %p237, %p238
      %p241 = scmp.ne.s32.totalorder %s226, %s240
      %p242 = scmp.eq.s32.totalorder %s27, 0
      %p243 = por %p241, %p242
      %s244 = ssub.s32 %s21, %s28
      %p245 = scmp.eq.s32.totalorder %s244, 0
      %s247 = sadd.s32 %s246, 1
      %s248 = scalar_select %p245, %s246, %s247
      %p251 = pneg %p245
      %p252 = scmp.eq.s32.totalorder %s21, 7
      %p253 = por %p251, %p252
      %p254 = scmp.ne.s32.totalorder %s246, %s249
      %p255 = scmp.eq.s32.totalorder %s21, 0
      %p256 = por %p254, %p255
      %p257 = scmp.ne.s32.totalorder %s246, %s249
      %p258 = scmp.eq.s32.totalorder %s26, 7
      %p259 = por %p257, %p258
      %p260 = scmp.ne.s32.totalorder %s249, %s250
      %p261 = scmp.eq.s32.totalorder %s26, 0
      %p262 = por %p260, %p261
      %p263 = scmp.ne.s32.totalorder %s249, %s250
      %p264 = scmp.eq.s32.totalorder %s27, 7
      %p265 = por %p263, %p264
      %p267 = scmp.ne.s32.totalorder %s250, %s266
      %p268 = scmp.eq.s32.totalorder %s27, 0
      %p269 = por %p267, %p268
      %s271 = sadd.s32 %s270, 1
      %p274 = scmp.eq.s32.totalorder %s21, 7
      %p275 = scmp.ne.s32.totalorder %s270, %s272
      %p276 = scmp.eq.s32.totalorder %s21, 0
      %p277 = por %p275, %p276
      %p278 = scmp.ne.s32.totalorder %s270, %s272
      %p279 = scmp.eq.s32.totalorder %s26, 7
      %p280 = por %p278, %p279
      %p281 = scmp.ne.s32.totalorder %s272, %s273
      %p282 = scmp.eq.s32.totalorder %s26, 0
      %p283 = por %p281, %p282
      %p284 = scmp.ne.s32.totalorder %s272, %s273
      %p285 = scmp.eq.s32.totalorder %s27, 7
      %p286 = por %p284, %p285
      %p288 = scmp.ne.s32.totalorder %s273, %s287
      %p289 = scmp.eq.s32.totalorder %s27, 0
      %p290 = por %p288, %p289
      %p291 = scmp.le.s32.totalorder 1, %s21
      %p292 = scmp.lt.s32.totalorder %s21, 9
      %p293 = pnand %p291, %p292
      %p294 = pneg %p293
      // Predicated region
      $region9: #{tpu_custom_call.1} parent=5 // pred_check
        _
      $region10: #{tpu_custom_call.1} parent=5 // pred_check_branch
        %296 = sbr.rel (%p293) target = $region12
      $region11: #{tpu_custom_call.1} parent=5 // pred_region
        %s297 = ssub.s32 %s21, 1
        // Predicated region
        $region13: #{tpu_custom_call.1} parent=11 // pred_check
          %p298 = pneg %p68
        $region14: #{tpu_custom_call.1} parent=11 // pred_check_branch
          %300 = sbr.rel (%p298) target = $region16
        $region15: #{tpu_custom_call.1} parent=11 // pred_region
          _
        $region16: #{tpu_custom_call.1} parent=11 // pred_fallthru
          _
        // Predicated region
        $region17: #{tpu_custom_call.1} parent=11 // pred_check
          %p301 = pneg %p89
        $region18: #{tpu_custom_call.1} parent=11 // pred_check_branch
          %303 = sbr.rel (%p301) target = $region20
        $region19: #{tpu_custom_call.1} parent=11 // pred_region
          _
        $region20: #{tpu_custom_call.1} parent=11 // pred_fallthru
          _
        // Predicated region
        $region21: #{tpu_custom_call.1} parent=11 // pred_check
          %p304 = pneg %p110
        $region22: #{tpu_custom_call.1} parent=11 // pred_check_branch
          %306 = sbr.rel (%p304) target = $region24
        $region23: #{tpu_custom_call.1} parent=11 // pred_region
          _
        $region24: #{tpu_custom_call.1} parent=11 // pred_fallthru
          _
        // Predicated region
        $region25: #{tpu_custom_call.1} parent=11 // pred_check
          %p307 = pneg %p131
        $region26: #{tpu_custom_call.1} parent=11 // pred_check_branch
          %309 = sbr.rel (%p307) target = $region28
        $region27: #{tpu_custom_call.1} parent=11 // pred_region
          _
        $region28: #{tpu_custom_call.1} parent=11 // pred_fallthru
          _
        // Predicated region
        $region29: #{tpu_custom_call.1} parent=11 // pred_check
          %p310 = pneg %p152
        $region30: #{tpu_custom_call.1} parent=11 // pred_check_branch
          %312 = sbr.rel (%p310) target = $region32
        $region31: #{tpu_custom_call.1} parent=11 // pred_region
          _
        $region32: #{tpu_custom_call.1} parent=11 // pred_fallthru
          _
        // Predicated region
        $region33: #{tpu_custom_call.1} parent=11 // pred_check
          %p313 = pneg %p173
        $region34: #{tpu_custom_call.1} parent=11 // pred_check_branch
          %315 = sbr.rel (%p313) target = $region36
        $region35: #{tpu_custom_call.1} parent=11 // pred_region
          _
        $region36: #{tpu_custom_call.1} parent=11 // pred_fallthru
          _
        // Predicated region
        $region37: #{tpu_custom_call.1} parent=11 // pred_check
          %p316 = pneg %p194
        $region38: #{tpu_custom_call.1} parent=11 // pred_check_branch
          %318 = sbr.rel (%p316) target = $region40
        $region39: #{tpu_custom_call.1} parent=11 // pred_region
          _
        $region40: #{tpu_custom_call.1} parent=11 // pred_fallthru
          _
        // Predicated region
        $region41: #{tpu_custom_call.1} parent=11 // pred_check
          %p319 = pneg %p215
        $region42: #{tpu_custom_call.1} parent=11 // pred_check_branch
          %321 = sbr.rel (%p319) target = $region44
        $region43: #{tpu_custom_call.1} parent=11 // pred_region
          _
        $region44: #{tpu_custom_call.1} parent=11 // pred_fallthru
          _
        // Predicated region
        $region45: #{tpu_custom_call.1} parent=11 // pred_check
          %p322 = pneg %p236
        $region46: #{tpu_custom_call.1} parent=11 // pred_check_branch
          %324 = sbr.rel (%p322) target = $region48
        $region47: #{tpu_custom_call.1} parent=11 // pred_region
          _
        $region48: #{tpu_custom_call.1} parent=11 // pred_fallthru
          _
      $region12: #{tpu_custom_call.1} parent=5 // pred_fallthru
        _
      %p325 = scmp.lt.s32.totalorder %s21, 8
      // Predicated region
      $region49: #{tpu_custom_call.1} parent=5 // pred_check
        %p326 = pneg %p325
      $region50: #{tpu_custom_call.1} parent=5 // pred_check_branch
        %328 = sbr.rel (%p326) target = $region52
      $region51: #{tpu_custom_call.1} parent=5 // pred_region
        // Predicated region
        $region53: #{tpu_custom_call.1} parent=51 // pred_check
          %p329 = pneg %p41
        $region54: #{tpu_custom_call.1} parent=51 // pred_check_branch
          %331 = sbr.rel (%p329) target = $region56
        $region55: #{tpu_custom_call.1} parent=51 // pred_region
          %p332 = scmp.lt.s32.totalorder %s21, 7
          %s333 = scalar_select %p332, %s21, 7
          %s334 = smul.addr %s333, 16
          %s335 = smul.addr %s334, 8
          %s336 = scalar_lea.vmem %s0, %s335
        $region56: #{tpu_custom_call.1} parent=51 // pred_fallthru
          _
      $region52: #{tpu_custom_call.1} parent=5 // pred_fallthru
        _
      %p337 = scmp.le.s32.totalorder 1, %s21
      %p338 = scmp.lt.s32.totalorder %s21, 9
      %p339 = pnand %p337, %p338
      %p340 = pneg %p339
      // Predicated region
      $region57: #{tpu_custom_call.1} parent=5 // pred_check
        _
      $region58: #{tpu_custom_call.1} parent=5 // pred_check_branch
        %342 = sbr.rel (%p339) target = $region60
      $region59: #{tpu_custom_call.1} parent=5 // pred_region
        %s343 = ssub.s32 %s21, 1
        %p344 = scmp.lt.s32.totalorder %s26, 7
        %s345 = scalar_select %p344, %s26, 7
        %s346 = smul.addr %s345, 16
        %s347 = smul.addr %s346, 8
        %s348 = scalar_lea.vmem %s0, %s347
        %p349 = pneg %p47
        %p350 = pneg %p44
        %p351 = pneg %p68
        %p352 = pneg %p65
        %p353 = pneg %p89
        %p354 = pneg %p86
        %p355 = pneg %p110
        %p356 = pneg %p107
        %p357 = pneg %p131
        %p358 = pneg %p128
        %p359 = pneg %p152
        %p360 = pneg %p149
        %p361 = pneg %p173
        %p362 = pneg %p170
        %p363 = pneg %p194
        %p364 = pneg %p191
        %p365 = pneg %p215
        %p366 = pneg %p212
        %p367 = pneg %p236
        %p368 = pneg %p233
        %p369 = pneg %p262
        %p370 = pneg %p259
        %s371 = sand.u32 %s249, 1
        %s372 = scalar_lea.sflag [#allocation4], %s371
        %s373 = sand.u32 %s249, 1
        %s374 = smul.addr %s373, 128
        %s375 = scalar_lea.vmem [#allocation3], %s374
        %p376 = pneg %p283
        %p377 = pneg %p280
        %p378 = scmp.lt.s32.totalorder %s26, 7
        %s379 = scalar_select %p378, %s26, 7
        %s380 = smul.addr %s379, 16
        %s381 = smul.addr %s380, 8
        %s382 = scalar_lea.vmem %s0, %s381
        %p384 = scmp.eq.s32.totalorder %s26, 0
        // Predicated region
        $region61: #{tpu_custom_call.1} parent=59 // pred_check
          %p385 = pneg %p384
        $region62: #{tpu_custom_call.1} parent=59 // pred_check_branch
          %387 = sbr.rel (%p385) target = $region64
        $region63: #{tpu_custom_call.1} parent=59 // pred_region
          %v388 = vld [vmem:[%s1] sm:$0xff]
          %v389 = vld [vmem:[%s1 + $0x8] sm:$0xff]
          %v390 = vld [vmem:[%s1 + $0x10] sm:$0xff]
          %v391 = vld [vmem:[%s1 + $0x18] sm:$0xff]
          %v392 = vld [vmem:[%s1 + $0x20] sm:$0xff]
          %v393 = vld [vmem:[%s1 + $0x28] sm:$0xff]
          %v394 = vld [vmem:[%s1 + $0x30] sm:$0xff]
          %v395 = vld [vmem:[%s1 + $0x38] sm:$0xff]
          %v396 = vld [vmem:[%s1 + $0x40] sm:$0xff]
          %v397 = vld [vmem:[%s1 + $0x48] sm:$0xff]
          %v398 = vld [vmem:[%s1 + $0x50] sm:$0xff]
          %v399 = vld [vmem:[%s1 + $0x58] sm:$0xff]
          %v400 = vld [vmem:[%s1 + $0x60] sm:$0xff]
          %v401 = vld [vmem:[%s1 + $0x68] sm:$0xff]
          %v402 = vld [vmem:[%s1 + $0x70] sm:$0xff]
          %v403 = vld [vmem:[%s1 + $0x78] sm:$0xff]
          %vm404 = vcmask 261120
          %405 = vst.msk [vmem:[#allocation2] sm:$0xff] %vm404, %v388
          %406 = vst.msk [vmem:[#allocation2 + $0x8] sm:$0xff] %vm404, %v389
          %407 = vst.msk [vmem:[#allocation2 + $0x10] sm:$0xff] %vm404, %v390
          %408 = vst.msk [vmem:[#allocation2 + $0x18] sm:$0xff] %vm404, %v391
          %409 = vst.msk [vmem:[#allocation2 + $0x20] sm:$0xff] %vm404, %v392
          %410 = vst.msk [vmem:[#allocation2 + $0x28] sm:$0xff] %vm404, %v393
          %411 = vst.msk [vmem:[#allocation2 + $0x30] sm:$0xff] %vm404, %v394
          %412 = vst.msk [vmem:[#allocation2 + $0x38] sm:$0xff] %vm404, %v395
          %413 = vst.msk [vmem:[#allocation2 + $0x40] sm:$0xff] %vm404, %v396
          %414 = vst.msk [vmem:[#allocation2 + $0x48] sm:$0xff] %vm404, %v397
          %415 = vst.msk [vmem:[#allocation2 + $0x50] sm:$0xff] %vm404, %v398
          %416 = vst.msk [vmem:[#allocation2 + $0x58] sm:$0xff] %vm404, %v399
          %417 = vst.msk [vmem:[#allocation2 + $0x60] sm:$0xff] %vm404, %v400
          %418 = vst.msk [vmem:[#allocation2 + $0x68] sm:$0xff] %vm404, %v401
          %419 = vst.msk [vmem:[#allocation2 + $0x70] sm:$0xff] %vm404, %v402
          %420 = vst.msk [vmem:[#allocation2 + $0x78] sm:$0xff] %vm404, %v403
        $region64: #{tpu_custom_call.1} parent=59 // pred_fallthru
          _
        %v421 = vld [vmem:[#allocation2] sm:$0xff]
        %v422 = vld [vmem:[#allocation2 + $0x8] sm:$0xff]
        %v423 = vld [vmem:[#allocation2 + $0x10] sm:$0xff]
        %v424 = vld [vmem:[#allocation2 + $0x18] sm:$0xff]
        %v425 = vld [vmem:[#allocation2 + $0x20] sm:$0xff]
        %v426 = vld [vmem:[#allocation2 + $0x28] sm:$0xff]
        %v427 = vld [vmem:[#allocation2 + $0x30] sm:$0xff]
        %v428 = vld [vmem:[#allocation2 + $0x38] sm:$0xff]
        %v429 = vld [vmem:[#allocation2 + $0x40] sm:$0xff]
        %v430 = vld [vmem:[#allocation2 + $0x48] sm:$0xff]
        %v431 = vld [vmem:[#allocation2 + $0x50] sm:$0xff]
        %v432 = vld [vmem:[#allocation2 + $0x58] sm:$0xff]
        %v433 = vld [vmem:[#allocation2 + $0x60] sm:$0xff]
        %v434 = vld [vmem:[#allocation2 + $0x68] sm:$0xff]
        %v435 = vld [vmem:[#allocation2 + $0x70] sm:$0xff]
        %v436 = vld [vmem:[#allocation2 + $0x78] sm:$0xff]
        %v437 = vld [vmem:[%s382] sm:$0xff]
        %v438 = vld [vmem:[%s382 + $0x8] sm:$0xff]
        %v439 = vld [vmem:[%s382 + $0x10] sm:$0xff]
        %v440 = vld [vmem:[%s382 + $0x18] sm:$0xff]
        %v441 = vld [vmem:[%s382 + $0x20] sm:$0xff]
        %v442 = vld [vmem:[%s382 + $0x28] sm:$0xff]
        %v443 = vld [vmem:[%s382 + $0x30] sm:$0xff]
        %v444 = vld [vmem:[%s382 + $0x38] sm:$0xff]
        %v445 = vld [vmem:[%s382 + $0x40] sm:$0xff]
        %v446 = vld [vmem:[%s382 + $0x48] sm:$0xff]
        %v447 = vld [vmem:[%s382 + $0x50] sm:$0xff]
        %v448 = vld [vmem:[%s382 + $0x58] sm:$0xff]
        %v449 = vld [vmem:[%s382 + $0x60] sm:$0xff]
        %v450 = vld [vmem:[%s382 + $0x68] sm:$0xff]
        %v451 = vld [vmem:[%s382 + $0x70] sm:$0xff]
        %v452 = vld [vmem:[%s382 + $0x78] sm:$0xff]
        %v453 = vpack.c.bf16 %v438, %v437
        %v454 = vpack.c.bf16 %v440, %v439
        %v455 = vpack.c.bf16 %v442, %v441
        %v456 = vpack.c.bf16 %v444, %v443
        %v457 = vpack.c.bf16 %v446, %v445
        %v458 = vpack.c.bf16 %v448, %v447
        %v459 = vpack.c.bf16 %v450, %v449
        %v460 = vpack.c.bf16 %v452, %v451
        %v461 = vld [vmem:[%s2] sm:$0xf]
        %v462 = vld [vmem:[%s2 + $0x4] sm:$0xf]
        %v463 = vld [vmem:[%s2 + $0x8] sm:$0xf]
        %v464 = vld [vmem:[%s3] sm:$0x1]
        %v466 = vlaneseq
        %v467 = vshrl.u32 %v466, 7
        %v468 = vsub.s32 0, %v467
        %v469 = vrot.slane %v464, %v468
        %v474 = vunpack.c.l.b16 %v461
        %v475 = vunpack.c.l.b16 %v462
        %v476 = vunpack.c.l.b16 %v463
        %v477 = vpack.c.b16 %v475, %v474
        %v478 = vpack.c.b16 %v476, %v476
        %vm480 = vcmask 195584
        %v482 = vsel %vm480, %v453, 0
        %v485 = vsel %vm480, %v454, 0
        %v488 = vsel %vm480, %v455, 0
        %v491 = vsel %vm480, %v456, 0
        %v494 = vsel %vm480, %v457, 0
        %v497 = vsel %vm480, %v458, 0
        %v500 = vsel %vm480, %v459, 0
        %v503 = vsel %vm480, %v460, 0
        %vm505 = vcmask 1043456
        %v507 = vsel %vm505, %v478, 0
        %509 = vmatprep.subr.bf16.mxu0 0
        %510 = vmatpush1.bf16.msra.mxu0 0
        %511 = vmatprep.subr.bf16.mxu0 0
        %512 = vmatpush1.bf16.msra.mxu0 0
        %513 = vmatprep.subr.bf16.mxu0 0
        %514 = vmatpush1.bf16.msra.mxu0 0
        %515 = vmatprep.subr.bf16.mxu0 0
        %516 = vmatpush1.bf16.msra.mxu0 0
        %517 = vmatprep.subr.bf16.mxu0 0
        %518 = vmatpush1.bf16.msra.mxu0 0
        %519 = vmatprep.subr.bf16.mxu0 0
        %520 = vmatpush1.bf16.msra.mxu0 0
        %521 = vmatprep.subr.bf16.mxu0 0
        %522 = vmatpush1.bf16.msra.mxu0 %v507
        %523 = vmatprep.subr.bf16.mxu0 0
        %524 = vmatpush1.bf16.msra.mxu0 %v477
        %525 = vmatprep.subr.bf16.mxu0 0
        %526 = vmatpush2.bf16.msra.mxu0 0
        %527 = vmatprep.subr.bf16.mxu0 0
        %528 = vmatpush2.bf16.msra.mxu0 0
        %529 = vmatprep.subr.bf16.mxu0 0
        %530 = vmatpush2.bf16.msra.mxu0 0
        %531 = vmatprep.subr.bf16.mxu0 0
        %532 = vmatpush2.bf16.msra.mxu0 0
        %533 = vmatprep.subr.bf16.mxu0 0
        %534 = vmatpush2.bf16.msra.mxu0 0
        %535 = vmatprep.subr.bf16.mxu0 0
        %536 = vmatpush2.bf16.msra.mxu0 0
        %537 = vmatprep.subr.bf16.mxu0 0
        %538 = vmatpush2.bf16.msra.mxu0 0
        %539 = vmatprep.subr.bf16.mxu0 0
        %540 = vmatpush2.bf16.msra.mxu0 0
        %541 = vmatprep.mubr.bf16.mxu0 0
        %542 = vmatmul.mubr.bf16.gmra.mxu0 %v482
        %v543 = vpop.f32.mrf.mxu0
        %v544 = vadd.f32 %v469, %v543
        %v545 = vpop.f32.mrf.mxu0
        %v546 = vpop.f32.mrf.mxu0
        %v547 = vadd.f32 %v469, %v546
        %v548 = vpop.f32.mrf.mxu0
        %549 = vmatprep.mubr.bf16.mxu0 0
        %550 = vmatmul.mubr.bf16.gmra.mxu0 %v485
        %v551 = vpop.f32.mrf.mxu0
        %v552 = vadd.f32 %v469, %v551
        %v553 = vpop.f32.mrf.mxu0
        %v554 = vpop.f32.mrf.mxu0
        %v555 = vadd.f32 %v469, %v554
        %v556 = vpop.f32.mrf.mxu0
        %557 = vmatprep.mubr.bf16.mxu0 0
        %558 = vmatmul.mubr.bf16.gmra.mxu0 %v488
        %v559 = vpop.f32.mrf.mxu0
        %v560 = vadd.f32 %v469, %v559
        %v561 = vpop.f32.mrf.mxu0
        %v562 = vpop.f32.mrf.mxu0
        %v563 = vadd.f32 %v469, %v562
        %v564 = vpop.f32.mrf.mxu0
        %565 = vmatprep.mubr.bf16.mxu0 0
        %566 = vmatmul.mubr.bf16.gmra.mxu0 %v491
        %v567 = vpop.f32.mrf.mxu0
        %v568 = vadd.f32 %v469, %v567
        %v569 = vpop.f32.mrf.mxu0
        %v570 = vpop.f32.mrf.mxu0
        %v571 = vadd.f32 %v469, %v570
        %v572 = vpop.f32.mrf.mxu0
        %573 = vmatprep.mubr.bf16.mxu0 0
        %574 = vmatmul.mubr.bf16.gmra.mxu0 %v494
        %v575 = vpop.f32.mrf.mxu0
        %v576 = vadd.f32 %v469, %v575
        %v577 = vpop.f32.mrf.mxu0
        %v578 = vpop.f32.mrf.mxu0
        %v579 = vadd.f32 %v469, %v578
        %v580 = vpop.f32.mrf.mxu0
        %581 = vmatprep.mubr.bf16.mxu0 0
        %582 = vmatmul.mubr.bf16.gmra.mxu0 %v497
        %v583 = vpop.f32.mrf.mxu0
        %v584 = vadd.f32 %v469, %v583
        %v585 = vpop.f32.mrf.mxu0
        %v586 = vpop.f32.mrf.mxu0
        %v587 = vadd.f32 %v469, %v586
        %v588 = vpop.f32.mrf.mxu0
        %589 = vmatprep.mubr.bf16.mxu0 0
        %590 = vmatmul.mubr.bf16.gmra.mxu0 %v500
        %v591 = vpop.f32.mrf.mxu0
        %v592 = vadd.f32 %v469, %v591
        %v593 = vpop.f32.mrf.mxu0
        %v594 = vpop.f32.mrf.mxu0
        %v595 = vadd.f32 %v469, %v594
        %v596 = vpop.f32.mrf.mxu0
        %597 = vmatprep.mubr.bf16.mxu0 0
        %598 = vmatmul.mubr.bf16.gmra.mxu0 %v503
        %v599 = vpop.f32.mrf.mxu0
        %v600 = vadd.f32 %v469, %v599
        %v601 = vpop.f32.mrf.mxu0
        %v602 = vpop.f32.mrf.mxu0
        %v603 = vadd.f32 %v469, %v602
        %v604 = vpop.f32.mrf.mxu0
        %605 = vdwg.mxu0
        %v606 = vmax.f32 %v544, 0.0
        %v607 = vmax.f32 %v547, 0.0
        %v608 = vmax.f32 %v552, 0.0
        %v609 = vmax.f32 %v555, 0.0
        %v610 = vmax.f32 %v560, 0.0
        %v611 = vmax.f32 %v563, 0.0
        %v612 = vmax.f32 %v568, 0.0
        %v613 = vmax.f32 %v571, 0.0
        %v614 = vmax.f32 %v576, 0.0
        %v615 = vmax.f32 %v579, 0.0
        %v616 = vmax.f32 %v584, 0.0
        %v617 = vmax.f32 %v587, 0.0
        %v618 = vmax.f32 %v592, 0.0
        %v619 = vmax.f32 %v595, 0.0
        %v620 = vmax.f32 %v600, 0.0
        %v621 = vmax.f32 %v603, 0.0
        %638 = vrot.lane.b32.xlu0 %v421, 32
        %v639 = vpop.permute.xlu0 %638
        %640 = vrot.lane.b32.xlu0 %v422, 32
        %v641 = vpop.permute.xlu0 %640
        %642 = vrot.lane.b32.xlu0 %v423, 32
        %v643 = vpop.permute.xlu0 %642
        %644 = vrot.lane.b32.xlu0 %v424, 32
        %v645 = vpop.permute.xlu0 %644
        %646 = vrot.lane.b32.xlu0 %v425, 32
        %v647 = vpop.permute.xlu0 %646
        %648 = vrot.lane.b32.xlu0 %v426, 32
        %v649 = vpop.permute.xlu0 %648
        %650 = vrot.lane.b32.xlu0 %v427, 32
        %v651 = vpop.permute.xlu0 %650
        %652 = vrot.lane.b32.xlu0 %v428, 32
        %v653 = vpop.permute.xlu0 %652
        %654 = vrot.lane.b32.xlu0 %v429, 32
        %v655 = vpop.permute.xlu0 %654
        %656 = vrot.lane.b32.xlu0 %v430, 32
        %v657 = vpop.permute.xlu0 %656
        %658 = vrot.lane.b32.xlu0 %v431, 32
        %v659 = vpop.permute.xlu0 %658
        %660 = vrot.lane.b32.xlu0 %v432, 32
        %v661 = vpop.permute.xlu0 %660
        %662 = vrot.lane.b32.xlu0 %v433, 32
        %v663 = vpop.permute.xlu0 %662
        %664 = vrot.lane.b32.xlu0 %v434, 32
        %v665 = vpop.permute.xlu0 %664
        %666 = vrot.lane.b32.xlu0 %v435, 32
        %v667 = vpop.permute.xlu0 %666
        %668 = vrot.lane.b32.xlu0 %v436, 32
        %v669 = vpop.permute.xlu0 %668
        %vm686 = vcmask 261120
        %v687 = vsel %vm686, %v606, %v639
        %v688 = vsel %vm686, %v607, %v641
        %v689 = vsel %vm686, %v608, %v643
        %v690 = vsel %vm686, %v609, %v645
        %v691 = vsel %vm686, %v610, %v647
        %v692 = vsel %vm686, %v611, %v649
        %v693 = vsel %vm686, %v612, %v651
        %v694 = vsel %vm686, %v613, %v653
        %v695 = vsel %vm686, %v614, %v655
        %v696 = vsel %vm686, %v615, %v657
        %v697 = vsel %vm686, %v616, %v659
        %v698 = vsel %vm686, %v617, %v661
        %v699 = vsel %vm686, %v618, %v663
        %v700 = vsel %vm686, %v619, %v665
        %v701 = vsel %vm686, %v620, %v667
        %v702 = vsel %vm686, %v621, %v669
        %v703 = vpack.c.bf16 %v688, %v687
        %v704 = vpack.c.bf16 %v690, %v689
        %v705 = vpack.c.bf16 %v692, %v691
        %v706 = vpack.c.bf16 %v694, %v693
        %v707 = vpack.c.bf16 %v696, %v695
        %v708 = vpack.c.bf16 %v698, %v697
        %v709 = vpack.c.bf16 %v700, %v699
        %v710 = vpack.c.bf16 %v702, %v701
        %v711 = vld [vmem:[%s4] sm:$0xf]
        %v712 = vld [vmem:[%s4 + $0x4] sm:$0xf]
        %v713 = vld [vmem:[%s4 + $0x8] sm:$0xf]
        %v714 = vld [vmem:[%s4 + $0xc] sm:$0xf]
        %v715 = vld [vmem:[%s4 + $0x10] sm:$0xf]
        %v716 = vld [vmem:[%s4 + $0x14] sm:$0xf]
        %v717 = vld [vmem:[%s4 + $0x18] sm:$0xf]
        %v718 = vld [vmem:[%s4 + $0x1c] sm:$0xf]
        %v719 = vld [vmem:[%s6] sm:$0x1]
        %v721 = vlaneseq
        %v722 = vshrl.u32 %v721, 7
        %v723 = vsub.s32 0, %v722
        %v724 = vrot.slane %v719, %v723
        %v734 = vunpack.c.l.b16 %v711
        %v735 = vunpack.c.l.b16 %v712
        %v736 = vunpack.c.l.b16 %v713
        %v737 = vunpack.c.l.b16 %v714
        %v738 = vunpack.c.l.b16 %v715
        %v739 = vunpack.c.l.b16 %v716
        %v740 = vunpack.c.l.b16 %v717
        %v741 = vunpack.c.l.b16 %v718
        %v742 = vpack.c.b16 %v735, %v734
        %v743 = vpack.c.b16 %v737, %v736
        %v744 = vpack.c.b16 %v739, %v738
        %v745 = vpack.c.b16 %v741, %v740
        %vm750 = vcmask 523264
        %v752 = vsel %vm750, %v703, 0
        %v755 = vsel %vm750, %v704, 0
        %v758 = vsel %vm750, %v705, 0
        %v761 = vsel %vm750, %v706, 0
        %v764 = vsel %vm750, %v707, 0
        %v767 = vsel %vm750, %v708, 0
        %v770 = vsel %vm750, %v709, 0
        %v773 = vsel %vm750, %v710, 0
        %775 = vmatprep.subr.bf16.mxu0 0
        %776 = vmatpush1.bf16.msra.mxu0 0
        %777 = vmatprep.subr.bf16.mxu0 0
        %778 = vmatpush1.bf16.msra.mxu0 0
        %779 = vmatprep.subr.bf16.mxu0 0
        %780 = vmatpush1.bf16.msra.mxu0 0
        %781 = vmatprep.subr.bf16.mxu0 0
        %782 = vmatpush1.bf16.msra.mxu0 0
        %783 = vmatprep.subr.bf16.mxu0 0
        %784 = vmatpush1.bf16.msra.mxu0 %v745
        %785 = vmatprep.subr.bf16.mxu0 0
        %786 = vmatpush1.bf16.msra.mxu0 %v744
        %787 = vmatprep.subr.bf16.mxu0 0
        %788 = vmatpush1.bf16.msra.mxu0 %v743
        %789 = vmatprep.subr.bf16.mxu0 0
        %790 = vmatpush1.bf16.msra.mxu0 %v742
        %791 = vmatprep.subr.bf16.mxu0 0
        %792 = vmatpush2.bf16.msra.mxu0 0
        %793 = vmatprep.subr.bf16.mxu0 0
        %794 = vmatpush2.bf16.msra.mxu0 0
        %795 = vmatprep.subr.bf16.mxu0 0
        %796 = vmatpush2.bf16.msra.mxu0 0
        %797 = vmatprep.subr.bf16.mxu0 0
        %798 = vmatpush2.bf16.msra.mxu0 0
        %799 = vmatprep.subr.bf16.mxu0 0
        %800 = vmatpush2.bf16.msra.mxu0 0
        %801 = vmatprep.subr.bf16.mxu0 0
        %802 = vmatpush2.bf16.msra.mxu0 0
        %803 = vmatprep.subr.bf16.mxu0 0
        %804 = vmatpush2.bf16.msra.mxu0 0
        %805 = vmatprep.subr.bf16.mxu0 0
        %806 = vmatpush2.bf16.msra.mxu0 0
        %807 = vmatprep.mubr.bf16.mxu0 0
        %808 = vmatmul.mubr.bf16.gmra.mxu0 %v752
        %v809 = vpop.f32.mrf.mxu0
        %v810 = vadd.f32 %v724, %v809
        %v811 = vpop.f32.mrf.mxu0
        %v812 = vpop.f32.mrf.mxu0
        %v813 = vadd.f32 %v724, %v812
        %v814 = vpop.f32.mrf.mxu0
        %815 = vmatprep.mubr.bf16.mxu0 0
        %816 = vmatmul.mubr.bf16.gmra.mxu0 %v755
        %v817 = vpop.f32.mrf.mxu0
        %v818 = vadd.f32 %v724, %v817
        %v819 = vpop.f32.mrf.mxu0
        %v820 = vpop.f32.mrf.mxu0
        %v821 = vadd.f32 %v724, %v820
        %v822 = vpop.f32.mrf.mxu0
        %823 = vmatprep.mubr.bf16.mxu0 0
        %824 = vmatmul.mubr.bf16.gmra.mxu0 %v758
        %v825 = vpop.f32.mrf.mxu0
        %v826 = vadd.f32 %v724, %v825
        %v827 = vpop.f32.mrf.mxu0
        %v828 = vpop.f32.mrf.mxu0
        %v829 = vadd.f32 %v724, %v828
        %v830 = vpop.f32.mrf.mxu0
        %831 = vmatprep.mubr.bf16.mxu0 0
        %832 = vmatmul.mubr.bf16.gmra.mxu0 %v761
        %v833 = vpop.f32.mrf.mxu0
        %v834 = vadd.f32 %v724, %v833
        %v835 = vpop.f32.mrf.mxu0
        %v836 = vpop.f32.mrf.mxu0
        %v837 = vadd.f32 %v724, %v836
        %v838 = vpop.f32.mrf.mxu0
        %839 = vmatprep.mubr.bf16.mxu0 0
        %840 = vmatmul.mubr.bf16.gmra.mxu0 %v764
        %v841 = vpop.f32.mrf.mxu0
        %v842 = vadd.f32 %v724, %v841
        %v843 = vpop.f32.mrf.mxu0
        %v844 = vpop.f32.mrf.mxu0
        %v845 = vadd.f32 %v724, %v844
        %v846 = vpop.f32.mrf.mxu0
        %847 = vmatprep.mubr.bf16.mxu0 0
        %848 = vmatmul.mubr.bf16.gmra.mxu0 %v767
        %v849 = vpop.f32.mrf.mxu0
        %v850 = vadd.f32 %v724, %v849
        %v851 = vpop.f32.mrf.mxu0
        %v852 = vpop.f32.mrf.mxu0
        %v853 = vadd.f32 %v724, %v852
        %v854 = vpop.f32.mrf.mxu0
        %855 = vmatprep.mubr.bf16.mxu0 0
        %856 = vmatmul.mubr.bf16.gmra.mxu0 %v770
        %v857 = vpop.f32.mrf.mxu0
        %v858 = vadd.f32 %v724, %v857
        %v859 = vpop.f32.mrf.mxu0
        %v860 = vpop.f32.mrf.mxu0
        %v861 = vadd.f32 %v724, %v860
        %v862 = vpop.f32.mrf.mxu0
        %863 = vmatprep.mubr.bf16.mxu0 0
        %864 = vmatmul.mubr.bf16.gmra.mxu0 %v773
        %v865 = vpop.f32.mrf.mxu0
        %v866 = vadd.f32 %v724, %v865
        %v867 = vpop.f32.mrf.mxu0
        %v868 = vpop.f32.mrf.mxu0
        %v869 = vadd.f32 %v724, %v868
        %v870 = vpop.f32.mrf.mxu0
        %871 = vdwg.mxu0
        %v872 = vpack.c.bf16 %v422, %v421
        %v873 = vpack.c.bf16 %v424, %v423
        %v874 = vpack.c.bf16 %v426, %v425
        %v875 = vpack.c.bf16 %v428, %v427
        %v876 = vpack.c.bf16 %v430, %v429
        %v877 = vpack.c.bf16 %v432, %v431
        %v878 = vpack.c.bf16 %v434, %v433
        %v879 = vpack.c.bf16 %v436, %v435
        %v880 = vld [vmem:[%s5] sm:$0xf]
        %v881 = vld [vmem:[%s5 + $0x4] sm:$0xf]
        %v882 = vld [vmem:[%s5 + $0x8] sm:$0xf]
        %v883 = vld [vmem:[%s5 + $0xc] sm:$0xf]
        %v884 = vxor.u32 %v810, 2147483648
        %v885 = vxor.u32 %v813, 2147483648
        %v886 = vxor.u32 %v818, 2147483648
        %v887 = vxor.u32 %v821, 2147483648
        %v888 = vxor.u32 %v826, 2147483648
        %v889 = vxor.u32 %v829, 2147483648
        %v890 = vxor.u32 %v834, 2147483648
        %v891 = vxor.u32 %v837, 2147483648
        %v892 = vxor.u32 %v842, 2147483648
        %v893 = vxor.u32 %v845, 2147483648
        %v894 = vxor.u32 %v850, 2147483648
        %v895 = vxor.u32 %v853, 2147483648
        %v896 = vxor.u32 %v858, 2147483648
        %v897 = vxor.u32 %v861, 2147483648
        %v898 = vxor.u32 %v866, 2147483648
        %v899 = vxor.u32 %v869, 2147483648
        %v900 = vmul.f32 %v884, 1.442695
        %v901 = vpow.pop %v900
        %v902 = vmul.f32 %v885, 1.442695
        %v903 = vpow.pop %v902
        %v904 = vmul.f32 %v886, 1.442695
        %v905 = vpow.pop %v904
        %v906 = vmul.f32 %v887, 1.442695
        %v907 = vpow.pop %v906
        %v908 = vmul.f32 %v888, 1.442695
        %v909 = vpow.pop %v908
        %v910 = vmul.f32 %v889, 1.442695
        %v911 = vpow.pop %v910
        %v912 = vmul.f32 %v890, 1.442695
        %v913 = vpow.pop %v912
        %v914 = vmul.f32 %v891, 1.442695
        %v915 = vpow.pop %v914
        %v916 = vmul.f32 %v892, 1.442695
        %v917 = vpow.pop %v916
        %v918 = vmul.f32 %v893, 1.442695
        %v919 = vpow.pop %v918
        %v920 = vmul.f32 %v894, 1.442695
        %v921 = vpow.pop %v920
        %v922 = vmul.f32 %v895, 1.442695
        %v923 = vpow.pop %v922
        %v924 = vmul.f32 %v896, 1.442695
        %v925 = vpow.pop %v924
        %v926 = vmul.f32 %v897, 1.442695
        %v927 = vpow.pop %v926
        %v928 = vmul.f32 %v898, 1.442695
        %v929 = vpow.pop %v928
        %v930 = vmul.f32 %v899, 1.442695
        %v931 = vpow.pop %v930
        %v932 = vadd.f32 %v901, 1.0
        %v933 = vadd.f32 %v903, 1.0
        %v934 = vadd.f32 %v905, 1.0
        %v935 = vadd.f32 %v907, 1.0
        %v936 = vadd.f32 %v909, 1.0
        %v937 = vadd.f32 %v911, 1.0
        %v938 = vadd.f32 %v913, 1.0
        %v939 = vadd.f32 %v915, 1.0
        %v940 = vadd.f32 %v917, 1.0
        %v941 = vadd.f32 %v919, 1.0
        %v942 = vadd.f32 %v921, 1.0
        %v943 = vadd.f32 %v923, 1.0
        %v944 = vadd.f32 %v925, 1.0
        %v945 = vadd.f32 %v927, 1.0
        %v946 = vadd.f32 %v929, 1.0
        %v947 = vadd.f32 %v931, 1.0
        %v948 = vrcp.pop %v932
        %v949 = vmul.f32 1.0, %v948
        %v950 = vrcp.pop %v933
        %v951 = vmul.f32 1.0, %v950
        %v952 = vrcp.pop %v934
        %v953 = vmul.f32 1.0, %v952
        %v954 = vrcp.pop %v935
        %v955 = vmul.f32 1.0, %v954
        %v956 = vrcp.pop %v936
        %v957 = vmul.f32 1.0, %v956
        %v958 = vrcp.pop %v937
        %v959 = vmul.f32 1.0, %v958
        %v960 = vrcp.pop %v938
        %v961 = vmul.f32 1.0, %v960
        %v962 = vrcp.pop %v939
        %v963 = vmul.f32 1.0, %v962
        %v964 = vrcp.pop %v940
        %v965 = vmul.f32 1.0, %v964
        %v966 = vrcp.pop %v941
        %v967 = vmul.f32 1.0, %v966
        %v968 = vrcp.pop %v942
        %v969 = vmul.f32 1.0, %v968
        %v970 = vrcp.pop %v943
        %v971 = vmul.f32 1.0, %v970
        %v972 = vrcp.pop %v944
        %v973 = vmul.f32 1.0, %v972
        %v974 = vrcp.pop %v945
        %v975 = vmul.f32 1.0, %v974
        %v976 = vrcp.pop %v946
        %v977 = vmul.f32 1.0, %v976
        %v978 = vrcp.pop %v947
        %v979 = vmul.f32 1.0, %v978
        %v980 = vld [vmem:[%s7] sm:$0x1]
        %v982 = vlaneseq
        %v983 = vshrl.u32 %v982, 7
        %v984 = vsub.s32 0, %v983
        %v985 = vrot.slane %v980, %v984
        %v991 = vunpack.c.l.b16 %v880
        %v992 = vunpack.c.l.b16 %v881
        %v993 = vunpack.c.l.b16 %v882
        %v994 = vunpack.c.l.b16 %v883
        %v995 = vpack.c.b16 %v992, %v991
        %v996 = vpack.c.b16 %v994, %v993
        %v1000 = vsel %vm686, %v872, 0
        %v1003 = vsel %vm686, %v873, 0
        %v1006 = vsel %vm686, %v874, 0
        %v1009 = vsel %vm686, %v875, 0
        %v1012 = vsel %vm686, %v876, 0
        %v1015 = vsel %vm686, %v877, 0
        %v1018 = vsel %vm686, %v878, 0
        %v1021 = vsel %vm686, %v879, 0
        %1023 = vmatprep.subr.bf16.mxu0 0
        %1024 = vmatpush1.bf16.msra.mxu0 0
        %1025 = vmatprep.subr.bf16.mxu0 0
        %1026 = vmatpush1.bf16.msra.mxu0 0
        %1027 = vmatprep.subr.bf16.mxu0 0
        %1028 = vmatpush1.bf16.msra.mxu0 0
        %1029 = vmatprep.subr.bf16.mxu0 0
        %1030 = vmatpush1.bf16.msra.mxu0 0
        %1031 = vmatprep.subr.bf16.mxu0 0
        %1032 = vmatpush1.bf16.msra.mxu0 0
        %1033 = vmatprep.subr.bf16.mxu0 0
        %1034 = vmatpush1.bf16.msra.mxu0 0
        %1035 = vmatprep.subr.bf16.mxu0 0
        %1036 = vmatpush1.bf16.msra.mxu0 %v996
        %1037 = vmatprep.subr.bf16.mxu0 0
        %1038 = vmatpush1.bf16.msra.mxu0 %v995
        %1039 = vmatprep.subr.bf16.mxu0 0
        %1040 = vmatpush2.bf16.msra.mxu0 0
        %1041 = vmatprep.subr.bf16.mxu0 0
        %1042 = vmatpush2.bf16.msra.mxu0 0
        %1043 = vmatprep.subr.bf16.mxu0 0
        %1044 = vmatpush2.bf16.msra.mxu0 0
        %1045 = vmatprep.subr.bf16.mxu0 0
        %1046 = vmatpush2.bf16.msra.mxu0 0
        %1047 = vmatprep.subr.bf16.mxu0 0
        %1048 = vmatpush2.bf16.msra.mxu0 0
        %1049 = vmatprep.subr.bf16.mxu0 0
        %1050 = vmatpush2.bf16.msra.mxu0 0
        %1051 = vmatprep.subr.bf16.mxu0 0
        %1052 = vmatpush2.bf16.msra.mxu0 0
        %1053 = vmatprep.subr.bf16.mxu0 0
        %1054 = vmatpush2.bf16.msra.mxu0 0
        %1055 = vmatprep.mubr.bf16.mxu0 0
        %1056 = vmatmul.mubr.bf16.gmra.mxu0 %v1000
        %v1057 = vpop.f32.mrf.mxu0
        %v1058 = vadd.f32 %v985, %v1057
        %v1059 = vpop.f32.mrf.mxu0
        %v1060 = vpop.f32.mrf.mxu0
        %v1061 = vadd.f32 %v985, %v1060
        %v1062 = vpop.f32.mrf.mxu0
        %1063 = vmatprep.mubr.bf16.mxu0 0
        %1064 = vmatmul.mubr.bf16.gmra.mxu0 %v1003
        %v1065 = vpop.f32.mrf.mxu0
        %v1066 = vadd.f32 %v985, %v1065
        %v1067 = vpop.f32.mrf.mxu0
        %v1068 = vpop.f32.mrf.mxu0
        %v1069 = vadd.f32 %v985, %v1068
        %v1070 = vpop.f32.mrf.mxu0
        %1071 = vmatprep.mubr.bf16.mxu0 0
        %1072 = vmatmul.mubr.bf16.gmra.mxu0 %v1006
        %v1073 = vpop.f32.mrf.mxu0
        %v1074 = vadd.f32 %v985, %v1073
        %v1075 = vpop.f32.mrf.mxu0
        %v1076 = vpop.f32.mrf.mxu0
        %v1077 = vadd.f32 %v985, %v1076
        %v1078 = vpop.f32.mrf.mxu0
        %1079 = vmatprep.mubr.bf16.mxu0 0
        %1080 = vmatmul.mubr.bf16.gmra.mxu0 %v1009
        %v1081 = vpop.f32.mrf.mxu0
        %v1082 = vadd.f32 %v985, %v1081
        %v1083 = vpop.f32.mrf.mxu0
        %v1084 = vpop.f32.mrf.mxu0
        %v1085 = vadd.f32 %v985, %v1084
        %v1086 = vpop.f32.mrf.mxu0
        %1087 = vmatprep.mubr.bf16.mxu0 0
        %1088 = vmatmul.mubr.bf16.gmra.mxu0 %v1012
        %v1089 = vpop.f32.mrf.mxu0
        %v1090 = vadd.f32 %v985, %v1089
        %v1091 = vpop.f32.mrf.mxu0
        %v1092 = vpop.f32.mrf.mxu0
        %v1093 = vadd.f32 %v985, %v1092
        %v1094 = vpop.f32.mrf.mxu0
        %1095 = vmatprep.mubr.bf16.mxu0 0
        %1096 = vmatmul.mubr.bf16.gmra.mxu0 %v1015
        %v1097 = vpop.f32.mrf.mxu0
        %v1098 = vadd.f32 %v985, %v1097
        %v1099 = vpop.f32.mrf.mxu0
        %v1100 = vpop.f32.mrf.mxu0
        %v1101 = vadd.f32 %v985, %v1100
        %v1102 = vpop.f32.mrf.mxu0
        %1103 = vmatprep.mubr.bf16.mxu0 0
        %1104 = vmatmul.mubr.bf16.gmra.mxu0 %v1018
        %v1105 = vpop.f32.mrf.mxu0
        %v1106 = vadd.f32 %v985, %v1105
        %v1107 = vpop.f32.mrf.mxu0
        %v1108 = vpop.f32.mrf.mxu0
        %v1109 = vadd.f32 %v985, %v1108
        %v1110 = vpop.f32.mrf.mxu0
        %1111 = vmatprep.mubr.bf16.mxu0 0
        %1112 = vmatmul.mubr.bf16.gmra.mxu0 %v1021
        %v1113 = vpop.f32.mrf.mxu0
        %v1114 = vadd.f32 %v985, %v1113
        %v1115 = vpop.f32.mrf.mxu0
        %v1116 = vpop.f32.mrf.mxu0
        %v1117 = vadd.f32 %v985, %v1116
        %v1118 = vpop.f32.mrf.mxu0
        %1119 = vdwg.mxu0
        %v1120 = vmul.f32 %v949, %v1058
        %v1121 = vmul.f32 %v951, %v1061
        %v1122 = vmul.f32 %v953, %v1066
        %v1123 = vmul.f32 %v955, %v1069
        %v1124 = vmul.f32 %v957, %v1074
        %v1125 = vmul.f32 %v959, %v1077
        %v1126 = vmul.f32 %v961, %v1082
        %v1127 = vmul.f32 %v963, %v1085
        %v1128 = vmul.f32 %v965, %v1090
        %v1129 = vmul.f32 %v967, %v1093
        %v1130 = vmul.f32 %v969, %v1098
        %v1131 = vmul.f32 %v971, %v1101
        %v1132 = vmul.f32 %v973, %v1106
        %v1133 = vmul.f32 %v975, %v1109
        %v1134 = vmul.f32 %v977, %v1114
        %v1135 = vmul.f32 %v979, %v1117
        %1152 = vrot.lane.b32.xlu0 %v1120, 64
        %v1153 = vpop.permute.xlu0 %1152
        %1154 = vrot.lane.b32.xlu0 %v1121, 64
        %v1155 = vpop.permute.xlu0 %1154
        %1156 = vrot.lane.b32.xlu0 %v1122, 64
        %v1157 = vpop.permute.xlu0 %1156
        %1158 = vrot.lane.b32.xlu0 %v1123, 64
        %v1159 = vpop.permute.xlu0 %1158
        %1160 = vrot.lane.b32.xlu0 %v1124, 64
        %v1161 = vpop.permute.xlu0 %1160
        %1162 = vrot.lane.b32.xlu0 %v1125, 64
        %v1163 = vpop.permute.xlu0 %1162
        %1164 = vrot.lane.b32.xlu0 %v1126, 64
        %v1165 = vpop.permute.xlu0 %1164
        %1166 = vrot.lane.b32.xlu0 %v1127, 64
        %v1167 = vpop.permute.xlu0 %1166
        %1168 = vrot.lane.b32.xlu0 %v1128, 64
        %v1169 = vpop.permute.xlu0 %1168
        %1170 = vrot.lane.b32.xlu0 %v1129, 64
        %v1171 = vpop.permute.xlu0 %1170
        %1172 = vrot.lane.b32.xlu0 %v1130, 64
        %v1173 = vpop.permute.xlu0 %1172
        %1174 = vrot.lane.b32.xlu0 %v1131, 64
        %v1175 = vpop.permute.xlu0 %1174
        %1176 = vrot.lane.b32.xlu0 %v1132, 64
        %v1177 = vpop.permute.xlu0 %1176
        %1178 = vrot.lane.b32.xlu0 %v1133, 64
        %v1179 = vpop.permute.xlu0 %1178
        %1180 = vrot.lane.b32.xlu0 %v1134, 64
        %v1181 = vpop.permute.xlu0 %1180
        %1182 = vrot.lane.b32.xlu0 %v1135, 64
        %v1183 = vpop.permute.xlu0 %1182
        %v1200 = vadd.f32 %v810, %v1153
        %v1201 = vadd.f32 %v813, %v1155
        %v1202 = vadd.f32 %v818, %v1157
        %v1203 = vadd.f32 %v821, %v1159
        %v1204 = vadd.f32 %v826, %v1161
        %v1205 = vadd.f32 %v829, %v1163
        %v1206 = vadd.f32 %v834, %v1165
        %v1207 = vadd.f32 %v837, %v1167
        %v1208 = vadd.f32 %v842, %v1169
        %v1209 = vadd.f32 %v845, %v1171
        %v1210 = vadd.f32 %v850, %v1173
        %v1211 = vadd.f32 %v853, %v1175
        %v1212 = vadd.f32 %v858, %v1177
        %v1213 = vadd.f32 %v861, %v1179
        %v1214 = vadd.f32 %v866, %v1181
        %v1215 = vadd.f32 %v869, %v1183
        %v1216 = vtanh.pop %v1200
        %v1217 = vtanh.pop %v1201
        %v1218 = vtanh.pop %v1202
        %v1219 = vtanh.pop %v1203
        %v1220 = vtanh.pop %v1204
        %v1221 = vtanh.pop %v1205
        %v1222 = vtanh.pop %v1206
        %v1223 = vtanh.pop %v1207
        %v1224 = vtanh.pop %v1208
        %v1225 = vtanh.pop %v1209
        %v1226 = vtanh.pop %v1210
        %v1227 = vtanh.pop %v1211
        %v1228 = vtanh.pop %v1212
        %v1229 = vtanh.pop %v1213
        %v1230 = vtanh.pop %v1214
        %v1231 = vtanh.pop %v1215
        %v1232 = vsub.f32 1.0, %v949
        %v1233 = vsub.f32 1.0, %v951
        %v1234 = vsub.f32 1.0, %v953
        %v1235 = vsub.f32 1.0, %v955
        %v1236 = vsub.f32 1.0, %v957
        %v1237 = vsub.f32 1.0, %v959
        %v1238 = vsub.f32 1.0, %v961
        %v1239 = vsub.f32 1.0, %v963
        %v1240 = vsub.f32 1.0, %v965
        %v1241 = vsub.f32 1.0, %v967
        %v1242 = vsub.f32 1.0, %v969
        %v1243 = vsub.f32 1.0, %v971
        %v1244 = vsub.f32 1.0, %v973
        %v1245 = vsub.f32 1.0, %v975
        %v1246 = vsub.f32 1.0, %v977
        %v1247 = vsub.f32 1.0, %v979
        %1264 = vrot.lane.b32.xlu0 %v1216, 96
        %v1265 = vpop.permute.xlu0 %1264
        %1266 = vrot.lane.b32.xlu0 %v1217, 96
        %v1267 = vpop.permute.xlu0 %1266
        %1268 = vrot.lane.b32.xlu0 %v1218, 96
        %v1269 = vpop.permute.xlu0 %1268
        %1270 = vrot.lane.b32.xlu0 %v1219, 96
        %v1271 = vpop.permute.xlu0 %1270
        %1272 = vrot.lane.b32.xlu0 %v1220, 96
        %v1273 = vpop.permute.xlu0 %1272
        %1274 = vrot.lane.b32.xlu0 %v1221, 96
        %v1275 = vpop.permute.xlu0 %1274
        %1276 = vrot.lane.b32.xlu0 %v1222, 96
        %v1277 = vpop.permute.xlu0 %1276
        %1278 = vrot.lane.b32.xlu0 %v1223, 96
        %v1279 = vpop.permute.xlu0 %1278
        %1280 = vrot.lane.b32.xlu0 %v1224, 96
        %v1281 = vpop.permute.xlu0 %1280
        %1282 = vrot.lane.b32.xlu0 %v1225, 96
        %v1283 = vpop.permute.xlu0 %1282
        %1284 = vrot.lane.b32.xlu0 %v1226, 96
        %v1285 = vpop.permute.xlu0 %1284
        %1286 = vrot.lane.b32.xlu0 %v1227, 96
        %v1287 = vpop.permute.xlu0 %1286
        %1288 = vrot.lane.b32.xlu0 %v1228, 96
        %v1289 = vpop.permute.xlu0 %1288
        %1290 = vrot.lane.b32.xlu0 %v1229, 96
        %v1291 = vpop.permute.xlu0 %1290
        %1292 = vrot.lane.b32.xlu0 %v1230, 96
        %v1293 = vpop.permute.xlu0 %1292
        %1294 = vrot.lane.b32.xlu0 %v1231, 96
        %v1295 = vpop.permute.xlu0 %1294
        %v1312 = vmul.f32 %v1232, %v1265
        %v1313 = vmul.f32 %v1233, %v1267
        %v1314 = vmul.f32 %v1234, %v1269
        %v1315 = vmul.f32 %v1235, %v1271
        %v1316 = vmul.f32 %v1236, %v1273
        %v1317 = vmul.f32 %v1237, %v1275
        %v1318 = vmul.f32 %v1238, %v1277
        %v1319 = vmul.f32 %v1239, %v1279
        %v1320 = vmul.f32 %v1240, %v1281
        %v1321 = vmul.f32 %v1241, %v1283
        %v1322 = vmul.f32 %v1242, %v1285
        %v1323 = vmul.f32 %v1243, %v1287
        %v1324 = vmul.f32 %v1244, %v1289
        %v1325 = vmul.f32 %v1245, %v1291
        %v1326 = vmul.f32 %v1246, %v1293
        %v1327 = vmul.f32 %v1247, %v1295
        %v1328 = vmul.f32 %v949, %v639
        %v1329 = vmul.f32 %v951, %v641
        %v1330 = vmul.f32 %v953, %v643
        %v1331 = vmul.f32 %v955, %v645
        %v1332 = vmul.f32 %v957, %v647
        %v1333 = vmul.f32 %v959, %v649
        %v1334 = vmul.f32 %v961, %v651
        %v1335 = vmul.f32 %v963, %v653
        %v1336 = vmul.f32 %v965, %v655
        %v1337 = vmul.f32 %v967, %v657
        %v1338 = vmul.f32 %v969, %v659
        %v1339 = vmul.f32 %v971, %v661
        %v1340 = vmul.f32 %v973, %v663
        %v1341 = vmul.f32 %v975, %v665
        %v1342 = vmul.f32 %v977, %v667
        %v1343 = vmul.f32 %v979, %v669
        %v1344 = vadd.f32 %v1312, %v1328
        %v1345 = vadd.f32 %v1313, %v1329
        %v1346 = vadd.f32 %v1314, %v1330
        %v1347 = vadd.f32 %v1315, %v1331
        %v1348 = vadd.f32 %v1316, %v1332
        %v1349 = vadd.f32 %v1317, %v1333
        %v1350 = vadd.f32 %v1318, %v1334
        %v1351 = vadd.f32 %v1319, %v1335
        %v1352 = vadd.f32 %v1320, %v1336
        %v1353 = vadd.f32 %v1321, %v1337
        %v1354 = vadd.f32 %v1322, %v1338
        %v1355 = vadd.f32 %v1323, %v1339
        %v1356 = vadd.f32 %v1324, %v1340
        %v1357 = vadd.f32 %v1325, %v1341
        %v1358 = vadd.f32 %v1326, %v1342
        %v1359 = vadd.f32 %v1327, %v1343
        %v1360 = vpack.c.bf16 %v1345, %v1344
        %v1361 = vpack.c.bf16 %v1347, %v1346
        %v1362 = vpack.c.bf16 %v1349, %v1348
        %v1363 = vpack.c.bf16 %v1351, %v1350
        %v1364 = vpack.c.bf16 %v1353, %v1352
        %v1365 = vpack.c.bf16 %v1355, %v1354
        %v1366 = vpack.c.bf16 %v1357, %v1356
        %v1367 = vpack.c.bf16 %v1359, %v1358
        %v1368 = vld [vmem:[%s8] sm:$0xf]
        %v1369 = vld [vmem:[%s8 + $0x4] sm:$0xf]
        %v1370 = vld [vmem:[%s8 + $0x8] sm:$0xf]
        %v1371 = vld [vmem:[%s8 + $0xc] sm:$0xf]
        %v1372 = vld [vmem:[%s9] sm:$0x1]
        %v1374 = vlaneseq
        %v1375 = vshrl.u32 %v1374, 7
        %v1376 = vsub.s32 0, %v1375
        %v1377 = vrot.slane %v1372, %v1376
        %1387 = vrot.lane.b32.xlu0 %v1360, 96
        %v1388 = vpop.permute.xlu0 %1387
        %1389 = vrot.lane.b32.xlu0 %v1361, 96
        %v1390 = vpop.permute.xlu0 %1389
        %1391 = vrot.lane.b32.xlu0 %v1362, 96
        %v1392 = vpop.permute.xlu0 %1391
        %1393 = vrot.lane.b32.xlu0 %v1363, 96
        %v1394 = vpop.permute.xlu0 %1393
        %1395 = vrot.lane.b32.xlu0 %v1364, 96
        %v1396 = vpop.permute.xlu0 %1395
        %1397 = vrot.lane.b32.xlu0 %v1365, 96
        %v1398 = vpop.permute.xlu0 %1397
        %1399 = vrot.lane.b32.xlu0 %v1366, 96
        %v1400 = vpop.permute.xlu0 %1399
        %1401 = vrot.lane.b32.xlu0 %v1367, 96
        %v1402 = vpop.permute.xlu0 %1401
        %v1407 = vunpack.c.l.b16 %v1368
        %v1408 = vunpack.c.l.b16 %v1369
        %v1409 = vunpack.c.l.b16 %v1370
        %v1410 = vunpack.c.l.b16 %v1371
        %v1411 = vpack.c.b16 %v1408, %v1407
        %v1412 = vpack.c.b16 %v1410, %v1409
        %v1416 = vsel %vm686, %v1388, 0
        %v1419 = vsel %vm686, %v1390, 0
        %v1422 = vsel %vm686, %v1392, 0
        %v1425 = vsel %vm686, %v1394, 0
        %v1428 = vsel %vm686, %v1396, 0
        %v1431 = vsel %vm686, %v1398, 0
        %v1434 = vsel %vm686, %v1400, 0
        %v1437 = vsel %vm686, %v1402, 0
        %1439 = vmatprep.subr.bf16.mxu0 0
        %1440 = vmatpush1.bf16.msra.mxu0 0
        %1441 = vmatprep.subr.bf16.mxu0 0
        %1442 = vmatpush1.bf16.msra.mxu0 0
        %1443 = vmatprep.subr.bf16.mxu0 0
        %1444 = vmatpush1.bf16.msra.mxu0 0
        %1445 = vmatprep.subr.bf16.mxu0 0
        %1446 = vmatpush1.bf16.msra.mxu0 0
        %1447 = vmatprep.subr.bf16.mxu0 0
        %1448 = vmatpush1.bf16.msra.mxu0 0
        %1449 = vmatprep.subr.bf16.mxu0 0
        %1450 = vmatpush1.bf16.msra.mxu0 0
        %1451 = vmatprep.subr.bf16.mxu0 0
        %1452 = vmatpush1.bf16.msra.mxu0 %v1412
        %1453 = vmatprep.subr.bf16.mxu0 0
        %1454 = vmatpush1.bf16.msra.mxu0 %v1411
        %1455 = vmatprep.subr.bf16.mxu0 0
        %1456 = vmatpush2.bf16.msra.mxu0 0
        %1457 = vmatprep.subr.bf16.mxu0 0
        %1458 = vmatpush2.bf16.msra.mxu0 0
        %1459 = vmatprep.subr.bf16.mxu0 0
        %1460 = vmatpush2.bf16.msra.mxu0 0
        %1461 = vmatprep.subr.bf16.mxu0 0
        %1462 = vmatpush2.bf16.msra.mxu0 0
        %1463 = vmatprep.subr.bf16.mxu0 0
        %1464 = vmatpush2.bf16.msra.mxu0 0
        %1465 = vmatprep.subr.bf16.mxu0 0
        %1466 = vmatpush2.bf16.msra.mxu0 0
        %1467 = vmatprep.subr.bf16.mxu0 0
        %1468 = vmatpush2.bf16.msra.mxu0 0
        %1469 = vmatprep.subr.bf16.mxu0 0
        %1470 = vmatpush2.bf16.msra.mxu0 0
        %1471 = vmatprep.mubr.bf16.mxu0 0
        %1472 = vmatmul.mubr.bf16.gmra.mxu0 %v1416
        %v1473 = vpop.f32.mrf.mxu0
        %v1474 = vadd.f32 %v1377, %v1473
        %v1475 = vpop.f32.mrf.mxu0
        %v1476 = vpop.f32.mrf.mxu0
        %v1477 = vadd.f32 %v1377, %v1476
        %v1478 = vpop.f32.mrf.mxu0
        %1479 = vmatprep.mubr.bf16.mxu0 0
        %1480 = vmatmul.mubr.bf16.gmra.mxu0 %v1419
        %v1481 = vpop.f32.mrf.mxu0
        %v1482 = vadd.f32 %v1377, %v1481
        %v1483 = vpop.f32.mrf.mxu0
        %v1484 = vpop.f32.mrf.mxu0
        %v1485 = vadd.f32 %v1377, %v1484
        %v1486 = vpop.f32.mrf.mxu0
        %1487 = vmatprep.mubr.bf16.mxu0 0
        %1488 = vmatmul.mubr.bf16.gmra.mxu0 %v1422
        %v1489 = vpop.f32.mrf.mxu0
        %v1490 = vadd.f32 %v1377, %v1489
        %v1491 = vpop.f32.mrf.mxu0
        %v1492 = vpop.f32.mrf.mxu0
        %v1493 = vadd.f32 %v1377, %v1492
        %v1494 = vpop.f32.mrf.mxu0
        %1495 = vmatprep.mubr.bf16.mxu0 0
        %1496 = vmatmul.mubr.bf16.gmra.mxu0 %v1425
        %v1497 = vpop.f32.mrf.mxu0
        %v1498 = vadd.f32 %v1377, %v1497
        %v1499 = vpop.f32.mrf.mxu0
        %v1500 = vpop.f32.mrf.mxu0
        %v1501 = vadd.f32 %v1377, %v1500
        %v1502 = vpop.f32.mrf.mxu0
        %1503 = vmatprep.mubr.bf16.mxu0 0
        %1504 = vmatmul.mubr.bf16.gmra.mxu0 %v1428
        %v1505 = vpop.f32.mrf.mxu0
        %v1506 = vadd.f32 %v1377, %v1505
        %v1507 = vpop.f32.mrf.mxu0
        %v1508 = vpop.f32.mrf.mxu0
        %v1509 = vadd.f32 %v1377, %v1508
        %v1510 = vpop.f32.mrf.mxu0
        %1511 = vmatprep.mubr.bf16.mxu0 0
        %1512 = vmatmul.mubr.bf16.gmra.mxu0 %v1431
        %v1513 = vpop.f32.mrf.mxu0
        %v1514 = vadd.f32 %v1377, %v1513
        %v1515 = vpop.f32.mrf.mxu0
        %v1516 = vpop.f32.mrf.mxu0
        %v1517 = vadd.f32 %v1377, %v1516
        %v1518 = vpop.f32.mrf.mxu0
        %1519 = vmatprep.mubr.bf16.mxu0 0
        %1520 = vmatmul.mubr.bf16.gmra.mxu0 %v1434
        %v1521 = vpop.f32.mrf.mxu0
        %v1522 = vadd.f32 %v1377, %v1521
        %v1523 = vpop.f32.mrf.mxu0
        %v1524 = vpop.f32.mrf.mxu0
        %v1525 = vadd.f32 %v1377, %v1524
        %v1526 = vpop.f32.mrf.mxu0
        %1527 = vmatprep.mubr.bf16.mxu0 0
        %1528 = vmatmul.mubr.bf16.gmra.mxu0 %v1437
        %v1529 = vpop.f32.mrf.mxu0
        %v1530 = vadd.f32 %v1377, %v1529
        %v1531 = vpop.f32.mrf.mxu0
        %v1532 = vpop.f32.mrf.mxu0
        %v1533 = vadd.f32 %v1377, %v1532
        %v1534 = vpop.f32.mrf.mxu0
        %1535 = vdwg.mxu0
        %1536 = vst [vmem:[%s375] sm:$0xff] %v1474
        %1537 = vst [vmem:[%s375 + $0x8] sm:$0xff] %v1477
        %1538 = vst [vmem:[%s375 + $0x10] sm:$0xff] %v1482
        %1539 = vst [vmem:[%s375 + $0x18] sm:$0xff] %v1485
        %1540 = vst [vmem:[%s375 + $0x20] sm:$0xff] %v1490
        %1541 = vst [vmem:[%s375 + $0x28] sm:$0xff] %v1493
        %1542 = vst [vmem:[%s375 + $0x30] sm:$0xff] %v1498
        %1543 = vst [vmem:[%s375 + $0x38] sm:$0xff] %v1501
        %1544 = vst [vmem:[%s375 + $0x40] sm:$0xff] %v1506
        %1545 = vst [vmem:[%s375 + $0x48] sm:$0xff] %v1509
        %1546 = vst [vmem:[%s375 + $0x50] sm:$0xff] %v1514
        %1547 = vst [vmem:[%s375 + $0x58] sm:$0xff] %v1517
        %1548 = vst [vmem:[%s375 + $0x60] sm:$0xff] %v1522
        %1549 = vst [vmem:[%s375 + $0x68] sm:$0xff] %v1525
        %1550 = vst [vmem:[%s375 + $0x70] sm:$0xff] %v1530
        %1551 = vst [vmem:[%s375 + $0x78] sm:$0xff] %v1533
        %1568 = vrot.lane.b32.xlu0 %v1344, 96
        %v1569 = vpop.permute.xlu0 %1568
        %1570 = vrot.lane.b32.xlu0 %v1345, 96
        %v1571 = vpop.permute.xlu0 %1570
        %1572 = vrot.lane.b32.xlu0 %v1346, 96
        %v1573 = vpop.permute.xlu0 %1572
        %1574 = vrot.lane.b32.xlu0 %v1347, 96
        %v1575 = vpop.permute.xlu0 %1574
        %1576 = vrot.lane.b32.xlu0 %v1348, 96
        %v1577 = vpop.permute.xlu0 %1576
        %1578 = vrot.lane.b32.xlu0 %v1349, 96
        %v1579 = vpop.permute.xlu0 %1578
        %1580 = vrot.lane.b32.xlu0 %v1350, 96
        %v1581 = vpop.permute.xlu0 %1580
        %1582 = vrot.lane.b32.xlu0 %v1351, 96
        %v1583 = vpop.permute.xlu0 %1582
        %1584 = vrot.lane.b32.xlu0 %v1352, 96
        %v1585 = vpop.permute.xlu0 %1584
        %1586 = vrot.lane.b32.xlu0 %v1353, 96
        %v1587 = vpop.permute.xlu0 %1586
        %1588 = vrot.lane.b32.xlu0 %v1354, 96
        %v1589 = vpop.permute.xlu0 %1588
        %1590 = vrot.lane.b32.xlu0 %v1355, 96
        %v1591 = vpop.permute.xlu0 %1590
        %1592 = vrot.lane.b32.xlu0 %v1356, 96
        %v1593 = vpop.permute.xlu0 %1592
        %1594 = vrot.lane.b32.xlu0 %v1357, 96
        %v1595 = vpop.permute.xlu0 %1594
        %1596 = vrot.lane.b32.xlu0 %v1358, 96
        %v1597 = vpop.permute.xlu0 %1596
        %1598 = vrot.lane.b32.xlu0 %v1359, 96
        %v1599 = vpop.permute.xlu0 %1598
        %1616 = vst.msk [vmem:[#allocation2] sm:$0xff] %vm686, %v1569
        %1617 = vst.msk [vmem:[#allocation2 + $0x8] sm:$0xff] %vm686, %v1571
        %1618 = vst.msk [vmem:[#allocation2 + $0x10] sm:$0xff] %vm686, %v1573
        %1619 = vst.msk [vmem:[#allocation2 + $0x18] sm:$0xff] %vm686, %v1575
        %1620 = vst.msk [vmem:[#allocation2 + $0x20] sm:$0xff] %vm686, %v1577
        %1621 = vst.msk [vmem:[#allocation2 + $0x28] sm:$0xff] %vm686, %v1579
        %1622 = vst.msk [vmem:[#allocation2 + $0x30] sm:$0xff] %vm686, %v1581
        %1623 = vst.msk [vmem:[#allocation2 + $0x38] sm:$0xff] %vm686, %v1583
        %1624 = vst.msk [vmem:[#allocation2 + $0x40] sm:$0xff] %vm686, %v1585
        %1625 = vst.msk [vmem:[#allocation2 + $0x48] sm:$0xff] %vm686, %v1587
        %1626 = vst.msk [vmem:[#allocation2 + $0x50] sm:$0xff] %vm686, %v1589
        %1627 = vst.msk [vmem:[#allocation2 + $0x58] sm:$0xff] %vm686, %v1591
        %1628 = vst.msk [vmem:[#allocation2 + $0x60] sm:$0xff] %vm686, %v1593
        %1629 = vst.msk [vmem:[#allocation2 + $0x68] sm:$0xff] %vm686, %v1595
        %1630 = vst.msk [vmem:[#allocation2 + $0x70] sm:$0xff] %vm686, %v1597
        %1631 = vst.msk [vmem:[#allocation2 + $0x78] sm:$0xff] %vm686, %v1599
        %p1632 = scmp.eq.s32.totalorder %s26, 7
        // Predicated region
        $region65: #{tpu_custom_call.1} parent=59 // pred_check
          %p1633 = pneg %p1632
        $region66: #{tpu_custom_call.1} parent=59 // pred_check_branch
          %1635 = sbr.rel (%p1633) target = $region68
        $region67: #{tpu_custom_call.1} parent=59 // pred_region
          %1636 = vst.msk [vmem:[%s11] sm:$0xff] %vm686, %v1569
          %1637 = vst.msk [vmem:[%s11 + $0x8] sm:$0xff] %vm686, %v1571
          %1638 = vst.msk [vmem:[%s11 + $0x10] sm:$0xff] %vm686, %v1573
          %1639 = vst.msk [vmem:[%s11 + $0x18] sm:$0xff] %vm686, %v1575
          %1640 = vst.msk [vmem:[%s11 + $0x20] sm:$0xff] %vm686, %v1577
          %1641 = vst.msk [vmem:[%s11 + $0x28] sm:$0xff] %vm686, %v1579
          %1642 = vst.msk [vmem:[%s11 + $0x30] sm:$0xff] %vm686, %v1581
          %1643 = vst.msk [vmem:[%s11 + $0x38] sm:$0xff] %vm686, %v1583
          %1644 = vst.msk [vmem:[%s11 + $0x40] sm:$0xff] %vm686, %v1585
          %1645 = vst.msk [vmem:[%s11 + $0x48] sm:$0xff] %vm686, %v1587
          %1646 = vst.msk [vmem:[%s11 + $0x50] sm:$0xff] %vm686, %v1589
          %1647 = vst.msk [vmem:[%s11 + $0x58] sm:$0xff] %vm686, %v1591
          %1648 = vst.msk [vmem:[%s11 + $0x60] sm:$0xff] %vm686, %v1593
          %1649 = vst.msk [vmem:[%s11 + $0x68] sm:$0xff] %vm686, %v1595
          %1650 = vst.msk [vmem:[%s11 + $0x70] sm:$0xff] %vm686, %v1597
          %1651 = vst.msk [vmem:[%s11 + $0x78] sm:$0xff] %vm686, %v1599
        $region68: #{tpu_custom_call.1} parent=59 // pred_fallthru
          _
        %s1652 = sand.u32 %s249, 1
        %s1653 = scalar_lea.sflag [#allocation4], %s1652
        %s1654 = sand.u32 %s249, 1
        %s1655 = smul.addr %s1654, 128
        %s1656 = scalar_lea.vmem [#allocation3], %s1655
        // Predicated region
        $region69: #{tpu_custom_call.1} parent=59 // pred_check
          %p1657 = pneg %p259
        $region70: #{tpu_custom_call.1} parent=59 // pred_check_branch
          %1659 = sbr.rel (%p1657) target = $region72
        $region71: #{tpu_custom_call.1} parent=59 // pred_region
          %s1661 = ssub.s32 2048, 2048
          %1662 = vsyncadd %s1653, %s1661
          %s1663 = smul.addr %s26, 16
          %s1664 = smul.addr %s1663, 128
          %s1665 = scalar_lea.hbm %s10, %s1664
          %s1666 = sshll.u32 %s1656, 4
          %s1667 = int_to_ptr.vmem [resolvable:$true] %s1666
          %1672 = dma.vmem_to_hbm [thread:$0]  %s1667, 2048, %s1665, %s1653, 128, 128, 8
        $region72: #{tpu_custom_call.1} parent=59 // pred_fallthru
          _
        // Predicated region
        $region73: #{tpu_custom_call.1} parent=59 // pred_check
          %p1673 = pneg %p280
        $region74: #{tpu_custom_call.1} parent=59 // pred_check_branch
          %1675 = sbr.rel (%p1673) target = $region76
        $region75: #{tpu_custom_call.1} parent=59 // pred_region
          _
        $region76: #{tpu_custom_call.1} parent=59 // pred_fallthru
          _
        // Predicated region
        $region77: #{tpu_custom_call.1} parent=59 // pred_check
          %p1676 = pneg %p280
        $region78: #{tpu_custom_call.1} parent=59 // pred_check_branch
          %1678 = sbr.rel (%p1676) target = $region80
        $region79: #{tpu_custom_call.1} parent=59 // pred_region
          _
        $region80: #{tpu_custom_call.1} parent=59 // pred_fallthru
          _
      $region60: #{tpu_custom_call.1} parent=5 // pred_fallthru
        _
      %p1679 = scmp.le.s32.totalorder 2, %s21
      // Predicated region
      $region81: #{tpu_custom_call.1} parent=5 // pred_check
        %p1680 = pneg %p1679
      $region82: #{tpu_custom_call.1} parent=5 // pred_check_branch
        %1682 = sbr.rel (%p1680) target = $region84
      $region83: #{tpu_custom_call.1} parent=5 // pred_region
        %s1683 = ssub.s32 %s21, 2
        // Predicated region
        $region85: #{tpu_custom_call.1} parent=83 // pred_check
          %p1684 = pneg %p265
        $region86: #{tpu_custom_call.1} parent=83 // pred_check_branch
          %1686 = sbr.rel (%p1684) target = $region88
        $region87: #{tpu_custom_call.1} parent=83 // pred_region
          %s1687 = sand.u32 %s250, 1
          %s1688 = scalar_lea.sflag [#allocation4], %s1687
          %s1689 = sand.u32 %s250, 1
          %s1690 = smul.addr %s1689, 128
          %s1691 = scalar_lea.vmem [#allocation3], %s1690
          %1692 = dma.done %s1688, 2048
        $region88: #{tpu_custom_call.1} parent=83 // pred_fallthru
          _
      $region84: #{tpu_custom_call.1} parent=5 // pred_fallthru
        _
    $region6: #{tpu_custom_call.1} parent=1 // loop_footer
      %s25 = sadd.s32 1, %s21
    $region7: #{tpu_custom_call.1} parent=1 // loop_footer_branch
      %20 = sbr.rel target = $region3
    $region8: #{tpu_custom_call.1} parent=1 // loop_exit
      _
    %1693 = vsyncpa [#allocation4], 1
    %s1694 = scalar_lea.sflag [#allocation4], 1
    %1695 = vsyncpa %s1694, 1

</llo_original>
